<compile_context>
chip_gen: v7x
topology: tpu7x:2x2x1
jax: 0.10.0
libtpu: 0.0.40
codegen_flags: <defaults>
</compile_context>

<pallas_src>
import functools

import jax
import jax.numpy as jnp
from jax import lax
from jax.experimental import pallas as pl
from jax.experimental.pallas import tpu as pltpu


def _block_kernel(x_ref, w1_ref, w2_ref, bn_ref, o_ref, xpad_ref, midpad_ref,
                  *, Bt, H, WCin, WCout, lead, mxu_dtype):
    """Bt samples per grid step; each conv is 3 banded matmuls on the MXU."""
    # Zero only the 1-row halos of the two staging buffers (cheap, re-done every step so
    # it is correct under megacore grid sharding; interior rows are fully overwritten).
    xpad_ref[lead - 1:lead, :] = jnp.zeros((1, WCin), jnp.float32)
    xpad_ref[lead + H:lead + H + 1, :] = jnp.zeros((1, WCin), jnp.float32)
    midpad_ref[lead - 1:lead, :] = jnp.zeros((1, WCout), jnp.float32)
    midpad_ref[lead + H:lead + H + 1, :] = jnp.zeros((1, WCout), jnp.float32)

    s1 = bn_ref[0:1, :]            # (1, W*Cout) folded BN params (f32)
    b1 = bn_ref[1:2, :]
    s2 = bn_ref[2:3, :]
    b2 = bn_ref[3:4, :]

    for b in range(Bt):                                   # small, statically unrolled
        x_b = x_ref[b]                                    # (H, W*Cin), bf16

        # ---- conv1: stage with H-halo, 3 banded matmuls (K = W*Cin) ----
        xpad_ref[lead:lead + H, :] = x_b.astype(jnp.float32)
        acc1 = jnp.zeros((H, WCout), jnp.float32)
        for kh in range(3):
            lhs = xpad_ref[lead - 1 + kh:lead - 1 + kh + H, :].astype(mxu_dtype)
            acc1 = acc1 + jnp.dot(lhs, w1_ref[kh], preferred_element_type=jnp.float32)

        # ---- bn1 (folded scale/shift) + ReLU (f32) ----
        out1 = jnp.maximum(acc1 * s1 + b1, 0.0)

        # ---- conv2 ----
        midpad_ref[lead:lead + H, :] = out1
        acc2 = jnp.zeros((H, WCout), jnp.float32)
        for kh in range(3):
            lhs = midpad_ref[lead - 1 + kh:lead - 1 + kh + H, :].astype(mxu_dtype)
            acc2 = acc2 + jnp.dot(lhs, w2_ref[kh], preferred_element_type=jnp.float32)

        # ---- bn2 + residual + ReLU, lane-dense (W*Cout = 128) store ----
        out2 = acc2 * s2 + b2
        o_ref[b] = jnp.maximum(out2 + x_b.astype(jnp.float32), 0.0)


def _banded_weights(w_oihw, W, dtype):
    """(Co, Ci, 3, 3) conv weights -> (3, W*Ci, W*Co) banded ("Toeplitz") matrices.

    out[h, w_out*Co + co] = sum_kh xpadH[h + kh, :] @ result[kh][:, w_out*Co + co],
    where xpadH is the input zero-padded along H only and lane-merged as (H+2, W*Ci).
    Zero padding along W is encoded by the band structure.
    """
    wt = jnp.transpose(w_oihw, (2, 3, 1, 0)).astype(jnp.float32)   # (kh, kw, Ci, Co)
    mats = []
    for kh in range(3):
        m = jnp.zeros((W * wt.shape[2], W * wt.shape[3]), jnp.float32)
        for kw in range(3):
            shift = jnp.eye(W, k=1 - kw, dtype=jnp.float32)        # w_in = w_out + kw - 1
            m = m + jnp.kron(shift, wt[kh, kw])
        mats.append(m)
    return jnp.stack(mats).astype(dtype)


def attn_basic_block(x_nchw, w1, w2, bn1, bn2, eps=1e-5, mxu_dtype=jnp.bfloat16):
    """x_nchw: (B, Cin, H, W); w1: (Cout, Cin, 3, 3); w2: (Cout, Cout, 3, 3);
    bn{1,2}: dict with gamma, beta, mean, var of shape (Cout,)."""
    B, Cin, H, W = x_nchw.shape
    Cout = w1.shape[0]
    assert Cin == Cout, "BasicBlock without downsample requires inplanes == planes"
    WCin, WCout = W * Cin, W * Cout

    # Layout glue: NCHW -> NHWC -> lane-merged (B, H, W*C), bf16 for the MXU / HBM DMA.
    x_lm = jnp.transpose(x_nchw, (0, 2, 3, 1)).reshape(B, H, WCin).astype(mxu_dtype)

    w1m = _banded_weights(w1, W, mxu_dtype)        # (3, W*Cin,  W*Cout)
    w2m = _banded_weights(w2, W, mxu_dtype)        # (3, W*Cout, W*Cout)

    def fold(bn):
        sc = bn["gamma"] / jnp.sqrt(bn["var"] + eps)
        sh = bn["beta"] - bn["mean"] * sc
        return jnp.tile(sc, W), jnp.tile(sh, W)    # lane-merged (W*Cout,)

    s1, b1 = fold(bn1)
    s2, b2 = fold(bn2)
    bn_packed = jnp.stack([s1, b1, s2, b2]).astype(jnp.float32)    # single (4, W*Cout) input

    # Several samples per grid step to amortize per-step pipeline overhead.
    Bt = next(bt for bt in (8, 4, 2, 1) if B % bt == 0)
    lead = 8                                       # interior rows start 8-sublane-aligned

    kernel = functools.partial(_block_kernel, Bt=Bt, H=H, WCin=WCin, WCout=WCout,
                               lead=lead, mxu_dtype=mxu_dtype)

    out_lm = pl.pallas_call(
        kernel,
        out_shape=jax.ShapeDtypeStruct((B, H, WCout), jnp.float32),
        grid_spec=pltpu.PrefetchScalarGridSpec(
            num_scalar_prefetch=0,
            grid=(B // Bt,),
            in_specs=[
                pl.BlockSpec((Bt, H, WCin), lambda i: (i, 0, 0)),
                pl.BlockSpec((3, WCin, WCout), lambda i: (0, 0, 0)),
                pl.BlockSpec((3, WCout, WCout), lambda i: (0, 0, 0)),
                pl.BlockSpec((4, WCout), lambda i: (0, 0)),
            ],
            out_specs=pl.BlockSpec((Bt, H, WCout), lambda i: (i, 0, 0)),
            scratch_shapes=[
                pltpu.VMEM((lead + H + 8, WCin), jnp.float32),    # H-padded x staging
                pltpu.VMEM((lead + H + 8, WCout), jnp.float32),   # H-padded conv2 input
            ],
        ),
        compiler_params=pltpu.CompilerParams(
            dimension_semantics=("parallel",)),
    )(x_lm, w1m, w2m, bn_packed)

    # undo lane merge + back to NCHW (interface glue)
    return jnp.transpose(out_lm.reshape(B, H, W, Cout), (0, 3, 1, 2))


def reference(x, w1, w2, bn1, bn2, eps=1e-5):
    """Plain-JAX NCHW reference (PyTorch eval-mode forward), matching the kernel's
    bf16 staging of the conv2 input."""
    def conv(x, w):
        return lax.conv_general_dilated(
            x, w, (1, 1), ((1, 1), (1, 1)),
            dimension_numbers=("NCHW", "OIHW", "NCHW"),
            precision=lax.Precision.HIGHEST)

    def bn(x, p):
        sc = (p["gamma"] / jnp.sqrt(p["var"] + eps)).reshape(1, -1, 1, 1)
        sh = (p["beta"] - p["mean"] * p["gamma"] / jnp.sqrt(p["var"] + eps)).reshape(1, -1, 1, 1)
        return x * sc + sh

    out = jnp.maximum(bn(conv(x, w1), bn1), 0.0)
    out = out.astype(jnp.bfloat16).astype(jnp.float32)   # kernel feeds conv2 in bf16
    out = bn(conv(out, w2), bn2)
    return jnp.maximum(out + x, 0.0)


if __name__ == "__main__":
    B, C, H, W = 2, 8, 16, 16          # inplanes = planes = 8, stride = 1, no downsample
    key = jax.random.PRNGKey(0)
    kx, kw1, kw2, kg1, kb1, kg2, kb2, km1, kv1, km2, kv2 = jax.random.split(key, 11)

    def bf16r(a):                      # test data pre-rounded to bf16 (kernel MXU dtype)
        return a.astype(jnp.bfloat16).astype(jnp.float32)

    x = bf16r(jax.random.normal(kx, (B, C, H, W), jnp.float32))
    w1 = bf16r(jax.random.normal(kw1, (C, C, 3, 3), jnp.float32) * 0.1)
    w2 = bf16r(jax.random.normal(kw2, (C, C, 3, 3), jnp.float32) * 0.1)
    bn1 = {
        "gamma": 1.0 + 0.1 * jax.random.normal(kg1, (C,), jnp.float32),
        "beta": 0.1 * jax.random.normal(kb1, (C,), jnp.float32),
        "mean": 0.05 * jax.random.normal(km1, (C,), jnp.float32),
        "var": 1.0 + 0.1 * jnp.abs(jax.random.normal(kv1, (C,), jnp.float32)),
    }
    bn2 = {
        "gamma": 1.0 + 0.1 * jax.random.normal(kg2, (C,), jnp.float32),
        "beta": 0.1 * jax.random.normal(kb2, (C,), jnp.float32),
        "mean": 0.05 * jax.random.normal(km2, (C,), jnp.float32),
        "var": 1.0 + 0.1 * jnp.abs(jax.random.normal(kv2, (C,), jnp.float32)),
    }

    out = jax.block_until_ready(attn_basic_block(x, w1, w2, bn1, bn2))
    ref = jax.block_until_ready(reference(x, w1, w2, bn1, bn2))

    assert out.shape == (B, C, H, W)
    max_err = float(jnp.max(jnp.abs(out - ref)))
    assert jnp.allclose(out, ref, rtol=1e-2, atol=1e-2), f"mismatch vs reference (max abs err {max_err})"

    print("KERNEL_OK")
</pallas_src>

<mosaic_0001>
module attributes {stable_mosaic.version = 11 : i64} {
  func.func @_block_kernel(%arg0: i32, %arg1: memref<2x16x128xbf16, #tpu.memory_space<vmem>>, %arg2: memref<3x128x128xbf16, #tpu.memory_space<vmem>>, %arg3: memref<3x128x128xbf16, #tpu.memory_space<vmem>>, %arg4: memref<4x128xf32, #tpu.memory_space<vmem>>, %arg5: memref<2x16x128xf32, #tpu.memory_space<vmem>>, %arg6: memref<32x128xf32, #tpu.memory_space<vmem>>, %arg7: memref<32x128xf32, #tpu.memory_space<vmem>>) attributes {dimension_semantics = [#tpu.dimension_semantics<parallel>], iteration_bounds = array<i64: 1>, scalar_prefetch = 0 : i64, scratch_operands = 2 : i64, tpu.core_type = #tpu.core_type<tc>, window_params = [{transform_indices = @transform_0, window_bounds = array<i64: 2, 16, 128>}, {pipeline_mode = #tpu.pipeline_mode<synchronous>, transform_indices = @transform_1, window_bounds = array<i64: 3, 128, 128>}, {pipeline_mode = #tpu.pipeline_mode<synchronous>, transform_indices = @transform_2, window_bounds = array<i64: 3, 128, 128>}, {pipeline_mode = #tpu.pipeline_mode<synchronous>, transform_indices = @transform_3, window_bounds = array<i64: 4, 128>}, {transform_indices = @transform_4, window_bounds = array<i64: 2, 16, 128>}]} {
    %cst = arith.constant 0.000000e+00 : f32
    %0 = vector.broadcast %cst : f32 to vector<1x128xf32>
    %c7 = arith.constant 7 : index
    %c0 = arith.constant 0 : index
    %1 = vector.load %arg6[%c7, %c0] : memref<32x128xf32, #tpu.memory_space<vmem>>, vector<1x128xf32>
    tpu.vector_store %arg6[%c7, %c0], %0 {strides = array<i32>} : memref<32x128xf32, #tpu.memory_space<vmem>>, vector<1x128xf32>,
    %cst_0 = arith.constant 0.000000e+00 : f32
    %2 = vector.broadcast %cst_0 : f32 to vector<1x128xf32>
    %c24 = arith.constant 24 : index
    %c0_1 = arith.constant 0 : index
    %3 = vector.load %arg6[%c24, %c0_1] : memref<32x128xf32, #tpu.memory_space<vmem>>, vector<1x128xf32>
    tpu.vector_store %arg6[%c24, %c0_1], %2 {strides = array<i32>} : memref<32x128xf32, #tpu.memory_space<vmem>>, vector<1x128xf32>,
    %cst_2 = arith.constant 0.000000e+00 : f32
    %4 = vector.broadcast %cst_2 : f32 to vector<1x128xf32>
    %c7_3 = arith.constant 7 : index
    %c0_4 = arith.constant 0 : index
    %5 = vector.load %arg7[%c7_3, %c0_4] : memref<32x128xf32, #tpu.memory_space<vmem>>, vector<1x128xf32>
    tpu.vector_store %arg7[%c7_3, %c0_4], %4 {strides = array<i32>} : memref<32x128xf32, #tpu.memory_space<vmem>>, vector<1x128xf32>,
    %cst_5 = arith.constant 0.000000e+00 : f32
    %6 = vector.broadcast %cst_5 : f32 to vector<1x128xf32>
    %c24_6 = arith.constant 24 : index
    %c0_7 = arith.constant 0 : index
    %7 = vector.load %arg7[%c24_6, %c0_7] : memref<32x128xf32, #tpu.memory_space<vmem>>, vector<1x128xf32>
    tpu.vector_store %arg7[%c24_6, %c0_7], %6 {strides = array<i32>} : memref<32x128xf32, #tpu.memory_space<vmem>>, vector<1x128xf32>,
    %c0_8 = arith.constant 0 : index
    %c0_9 = arith.constant 0 : index
    %8 = vector.load %arg4[%c0_8, %c0_9] : memref<4x128xf32, #tpu.memory_space<vmem>>, vector<1x128xf32>
    %c1 = arith.constant 1 : index
    %c0_10 = arith.constant 0 : index
    %9 = vector.load %arg4[%c1, %c0_10] : memref<4x128xf32, #tpu.memory_space<vmem>>, vector<1x128xf32>
    %c2 = arith.constant 2 : index
    %c0_11 = arith.constant 0 : index
    %10 = vector.load %arg4[%c2, %c0_11] : memref<4x128xf32, #tpu.memory_space<vmem>>, vector<1x128xf32>
    %c3 = arith.constant 3 : index
    %c0_12 = arith.constant 0 : index
    %11 = vector.load %arg4[%c3, %c0_12] : memref<4x128xf32, #tpu.memory_space<vmem>>, vector<1x128xf32>
    %c0_13 = arith.constant 0 : index
    %c0_14 = arith.constant 0 : index
    %c0_15 = arith.constant 0 : index
    %12 = vector.load %arg1[%c0_13, %c0_14, %c0_15] : memref<2x16x128xbf16, #tpu.memory_space<vmem>>, vector<1x16x128xbf16>
    %13 = vector.shape_cast %12 : vector<1x16x128xbf16> to vector<16x128xbf16>
    %14 = arith.extf %13 : vector<16x128xbf16> to vector<16x128xf32>
    %c8 = arith.constant 8 : index
    %c0_16 = arith.constant 0 : index
    %15 = vector.load %arg6[%c8, %c0_16] : memref<32x128xf32, #tpu.memory_space<vmem>>, vector<16x128xf32>
    tpu.vector_store %arg6[%c8, %c0_16], %14 {strides = array<i32>} : memref<32x128xf32, #tpu.memory_space<vmem>>, vector<16x128xf32>,
    %cst_17 = arith.constant 0.000000e+00 : f32
    %16 = vector.broadcast %cst_17 : f32 to vector<16x128xf32>
    %c7_18 = arith.constant 7 : index
    %c0_19 = arith.constant 0 : index
    %17 = vector.load %arg6[%c7_18, %c0_19] : memref<32x128xf32, #tpu.memory_space<vmem>>, vector<16x128xf32>
    %18 = arith.truncf %17 : vector<16x128xf32> to vector<16x128xbf16>
    %c0_20 = arith.constant 0 : index
    %c0_21 = arith.constant 0 : index
    %c0_22 = arith.constant 0 : index
    %19 = vector.load %arg2[%c0_20, %c0_21, %c0_22] : memref<3x128x128xbf16, #tpu.memory_space<vmem>>, vector<1x128x128xbf16>
    %20 = vector.shape_cast %19 : vector<1x128x128xbf16> to vector<128x128xbf16>
    %cst_23 = arith.constant dense<0.000000e+00> : vector<16x128xf32>
    %21 = tpu.matmul %18, %20, %cst_23 {dimension_numbers = #tpu.dot_dimension_numbers<[1], [0], [0], [1], [0, 0, 1, 1], [], []>} : vector<16x128xbf16>, vector<128x128xbf16>, vector<16x128xf32> -> vector<16x128xf32>
    %22 = arith.addf %16, %21 : vector<16x128xf32>
    %c8_24 = arith.constant 8 : index
    %c0_25 = arith.constant 0 : index
    %23 = vector.load %arg6[%c8_24, %c0_25] : memref<32x128xf32, #tpu.memory_space<vmem>>, vector<16x128xf32>
    %24 = arith.truncf %23 : vector<16x128xf32> to vector<16x128xbf16>
    %c1_26 = arith.constant 1 : index
    %c0_27 = arith.constant 0 : index
    %c0_28 = arith.constant 0 : index
    %25 = vector.load %arg2[%c1_26, %c0_27, %c0_28] : memref<3x128x128xbf16, #tpu.memory_space<vmem>>, vector<1x128x128xbf16>
    %26 = vector.shape_cast %25 : vector<1x128x128xbf16> to vector<128x128xbf16>
    %cst_29 = arith.constant dense<0.000000e+00> : vector<16x128xf32>
    %27 = tpu.matmul %24, %26, %cst_29 {dimension_numbers = #tpu.dot_dimension_numbers<[1], [0], [0], [1], [0, 0, 1, 1], [], []>} : vector<16x128xbf16>, vector<128x128xbf16>, vector<16x128xf32> -> vector<16x128xf32>
    %28 = arith.addf %22, %27 : vector<16x128xf32>
    %c9 = arith.constant 9 : index
    %c0_30 = arith.constant 0 : index
    %29 = vector.load %arg6[%c9, %c0_30] : memref<32x128xf32, #tpu.memory_space<vmem>>, vector<16x128xf32>
    %30 = arith.truncf %29 : vector<16x128xf32> to vector<16x128xbf16>
    %c2_31 = arith.constant 2 : index
    %c0_32 = arith.constant 0 : index
    %c0_33 = arith.constant 0 : index
    %31 = vector.load %arg2[%c2_31, %c0_32, %c0_33] : memref<3x128x128xbf16, #tpu.memory_space<vmem>>, vector<1x128x128xbf16>
    %32 = vector.shape_cast %31 : vector<1x128x128xbf16> to vector<128x128xbf16>
    %cst_34 = arith.constant dense<0.000000e+00> : vector<16x128xf32>
    %33 = tpu.matmul %30, %32, %cst_34 {dimension_numbers = #tpu.dot_dimension_numbers<[1], [0], [0], [1], [0, 0, 1, 1], [], []>} : vector<16x128xbf16>, vector<128x128xbf16>, vector<16x128xf32> -> vector<16x128xf32>
    %34 = arith.addf %28, %33 : vector<16x128xf32>
    %35 = vector.broadcast %8 : vector<1x128xf32> to vector<16x128xf32>
    %36 = arith.mulf %34, %35 : vector<16x128xf32>
    %37 = vector.broadcast %9 : vector<1x128xf32> to vector<16x128xf32>
    %38 = arith.addf %36, %37 : vector<16x128xf32>
    %cst_35 = arith.constant 0.000000e+00 : f32
    %39 = vector.broadcast %cst_35 : f32 to vector<16x128xf32>
    %40 = arith.maximumf %38, %39 : vector<16x128xf32>
    %c8_36 = arith.constant 8 : index
    %c0_37 = arith.constant 0 : index
    %41 = vector.load %arg7[%c8_36, %c0_37] : memref<32x128xf32, #tpu.memory_space<vmem>>, vector<16x128xf32>
    tpu.vector_store %arg7[%c8_36, %c0_37], %40 {strides = array<i32>} : memref<32x128xf32, #tpu.memory_space<vmem>>, vector<16x128xf32>,
    %cst_38 = arith.constant 0.000000e+00 : f32
    %42 = vector.broadcast %cst_38 : f32 to vector<16x128xf32>
    %c7_39 = arith.constant 7 : index
    %c0_40 = arith.constant 0 : index
    %43 = vector.load %arg7[%c7_39, %c0_40] : memref<32x128xf32, #tpu.memory_space<vmem>>, vector<16x128xf32>
    %44 = arith.truncf %43 : vector<16x128xf32> to vector<16x128xbf16>
    %c0_41 = arith.constant 0 : index
    %c0_42 = arith.constant 0 : index
    %c0_43 = arith.constant 0 : index
    %45 = vector.load %arg3[%c0_41, %c0_42, %c0_43] : memref<3x128x128xbf16, #tpu.memory_space<vmem>>, vector<1x128x128xbf16>
    %46 = vector.shape_cast %45 : vector<1x128x128xbf16> to vector<128x128xbf16>
    %cst_44 = arith.constant dense<0.000000e+00> : vector<16x128xf32>
    %47 = tpu.matmul %44, %46, %cst_44 {dimension_numbers = #tpu.dot_dimension_numbers<[1], [0], [0], [1], [0, 0, 1, 1], [], []>} : vector<16x128xbf16>, vector<128x128xbf16>, vector<16x128xf32> -> vector<16x128xf32>
    %48 = arith.addf %42, %47 : vector<16x128xf32>
    %c8_45 = arith.constant 8 : index
    %c0_46 = arith.constant 0 : index
    %49 = vector.load %arg7[%c8_45, %c0_46] : memref<32x128xf32, #tpu.memory_space<vmem>>, vector<16x128xf32>
    %50 = arith.truncf %49 : vector<16x128xf32> to vector<16x128xbf16>
    %c1_47 = arith.constant 1 : index
    %c0_48 = arith.constant 0 : index
    %c0_49 = arith.constant 0 : index
    %51 = vector.load %arg3[%c1_47, %c0_48, %c0_49] : memref<3x128x128xbf16, #tpu.memory_space<vmem>>, vector<1x128x128xbf16>
    %52 = vector.shape_cast %51 : vector<1x128x128xbf16> to vector<128x128xbf16>
    %cst_50 = arith.constant dense<0.000000e+00> : vector<16x128xf32>
    %53 = tpu.matmul %50, %52, %cst_50 {dimension_numbers = #tpu.dot_dimension_numbers<[1], [0], [0], [1], [0, 0, 1, 1], [], []>} : vector<16x128xbf16>, vector<128x128xbf16>, vector<16x128xf32> -> vector<16x128xf32>
    %54 = arith.addf %48, %53 : vector<16x128xf32>
    %c9_51 = arith.constant 9 : index
    %c0_52 = arith.constant 0 : index
    %55 = vector.load %arg7[%c9_51, %c0_52] : memref<32x128xf32, #tpu.memory_space<vmem>>, vector<16x128xf32>
    %56 = arith.truncf %55 : vector<16x128xf32> to vector<16x128xbf16>
    %c2_53 = arith.constant 2 : index
    %c0_54 = arith.constant 0 : index
    %c0_55 = arith.constant 0 : index
    %57 = vector.load %arg3[%c2_53, %c0_54, %c0_55] : memref<3x128x128xbf16, #tpu.memory_space<vmem>>, vector<1x128x128xbf16>
    %58 = vector.shape_cast %57 : vector<1x128x128xbf16> to vector<128x128xbf16>
    %cst_56 = arith.constant dense<0.000000e+00> : vector<16x128xf32>
    %59 = tpu.matmul %56, %58, %cst_56 {dimension_numbers = #tpu.dot_dimension_numbers<[1], [0], [0], [1], [0, 0, 1, 1], [], []>} : vector<16x128xbf16>, vector<128x128xbf16>, vector<16x128xf32> -> vector<16x128xf32>
    %60 = arith.addf %54, %59 : vector<16x128xf32>
    %61 = vector.broadcast %10 : vector<1x128xf32> to vector<16x128xf32>
    %62 = arith.mulf %60, %61 : vector<16x128xf32>
    %63 = vector.broadcast %11 : vector<1x128xf32> to vector<16x128xf32>
    %64 = arith.addf %62, %63 : vector<16x128xf32>
    %65 = arith.extf %13 : vector<16x128xbf16> to vector<16x128xf32>
    %66 = arith.addf %64, %65 : vector<16x128xf32>
    %cst_57 = arith.constant 0.000000e+00 : f32
    %67 = vector.broadcast %cst_57 : f32 to vector<16x128xf32>
    %68 = arith.maximumf %66, %67 : vector<16x128xf32>
    %c0_58 = arith.constant 0 : index
    %c0_59 = arith.constant 0 : index
    %c0_60 = arith.constant 0 : index
    %69 = vector.load %arg5[%c0_58, %c0_59, %c0_60] : memref<2x16x128xf32, #tpu.memory_space<vmem>>, vector<1x16x128xf32>
    %70 = vector.shape_cast %69 : vector<1x16x128xf32> to vector<16x128xf32>
    %71 = vector.shape_cast %68 : vector<16x128xf32> to vector<1x16x128xf32>
    tpu.vector_store %arg5[%c0_58, %c0_59, %c0_60], %71 {strides = array<i32>} : memref<2x16x128xf32, #tpu.memory_space<vmem>>, vector<1x16x128xf32>,
    %c1_61 = arith.constant 1 : index
    %c0_62 = arith.constant 0 : index
    %c0_63 = arith.constant 0 : index
    %72 = vector.load %arg1[%c1_61, %c0_62, %c0_63] : memref<2x16x128xbf16, #tpu.memory_space<vmem>>, vector<1x16x128xbf16>
    %73 = vector.shape_cast %72 : vector<1x16x128xbf16> to vector<16x128xbf16>
    %74 = arith.extf %73 : vector<16x128xbf16> to vector<16x128xf32>
    %c8_64 = arith.constant 8 : index
    %c0_65 = arith.constant 0 : index
    %75 = vector.load %arg6[%c8_64, %c0_65] : memref<32x128xf32, #tpu.memory_space<vmem>>, vector<16x128xf32>
    tpu.vector_store %arg6[%c8_64, %c0_65], %74 {strides = array<i32>} : memref<32x128xf32, #tpu.memory_space<vmem>>, vector<16x128xf32>,
    %cst_66 = arith.constant 0.000000e+00 : f32
    %76 = vector.broadcast %cst_66 : f32 to vector<16x128xf32>
    %c7_67 = arith.constant 7 : index
    %c0_68 = arith.constant 0 : index
    %77 = vector.load %arg6[%c7_67, %c0_68] : memref<32x128xf32, #tpu.memory_space<vmem>>, vector<16x128xf32>
    %78 = arith.truncf %77 : vector<16x128xf32> to vector<16x128xbf16>
    %c0_69 = arith.constant 0 : index
    %c0_70 = arith.constant 0 : index
    %c0_71 = arith.constant 0 : index
    %79 = vector.load %arg2[%c0_69, %c0_70, %c0_71] : memref<3x128x128xbf16, #tpu.memory_space<vmem>>, vector<1x128x128xbf16>
    %80 = vector.shape_cast %79 : vector<1x128x128xbf16> to vector<128x128xbf16>
    %cst_72 = arith.constant dense<0.000000e+00> : vector<16x128xf32>
    %81 = tpu.matmul %78, %80, %cst_72 {dimension_numbers = #tpu.dot_dimension_numbers<[1], [0], [0], [1], [0, 0, 1, 1], [], []>} : vector<16x128xbf16>, vector<128x128xbf16>, vector<16x128xf32> -> vector<16x128xf32>
    %82 = arith.addf %76, %81 : vector<16x128xf32>
    %c8_73 = arith.constant 8 : index
    %c0_74 = arith.constant 0 : index
    %83 = vector.load %arg6[%c8_73, %c0_74] : memref<32x128xf32, #tpu.memory_space<vmem>>, vector<16x128xf32>
    %84 = arith.truncf %83 : vector<16x128xf32> to vector<16x128xbf16>
    %c1_75 = arith.constant 1 : index
    %c0_76 = arith.constant 0 : index
    %c0_77 = arith.constant 0 : index
    %85 = vector.load %arg2[%c1_75, %c0_76, %c0_77] : memref<3x128x128xbf16, #tpu.memory_space<vmem>>, vector<1x128x128xbf16>
    %86 = vector.shape_cast %85 : vector<1x128x128xbf16> to vector<128x128xbf16>
    %cst_78 = arith.constant dense<0.000000e+00> : vector<16x128xf32>
    %87 = tpu.matmul %84, %86, %cst_78 {dimension_numbers = #tpu.dot_dimension_numbers<[1], [0], [0], [1], [0, 0, 1, 1], [], []>} : vector<16x128xbf16>, vector<128x128xbf16>, vector<16x128xf32> -> vector<16x128xf32>
    %88 = arith.addf %82, %87 : vector<16x128xf32>
    %c9_79 = arith.constant 9 : index
    %c0_80 = arith.constant 0 : index
    %89 = vector.load %arg6[%c9_79, %c0_80] : memref<32x128xf32, #tpu.memory_space<vmem>>, vector<16x128xf32>
    %90 = arith.truncf %89 : vector<16x128xf32> to vector<16x128xbf16>
    %c2_81 = arith.constant 2 : index
    %c0_82 = arith.constant 0 : index
    %c0_83 = arith.constant 0 : index
    %91 = vector.load %arg2[%c2_81, %c0_82, %c0_83] : memref<3x128x128xbf16, #tpu.memory_space<vmem>>, vector<1x128x128xbf16>
    %92 = vector.shape_cast %91 : vector<1x128x128xbf16> to vector<128x128xbf16>
    %cst_84 = arith.constant dense<0.000000e+00> : vector<16x128xf32>
    %93 = tpu.matmul %90, %92, %cst_84 {dimension_numbers = #tpu.dot_dimension_numbers<[1], [0], [0], [1], [0, 0, 1, 1], [], []>} : vector<16x128xbf16>, vector<128x128xbf16>, vector<16x128xf32> -> vector<16x128xf32>
    %94 = arith.addf %88, %93 : vector<16x128xf32>
    %95 = vector.broadcast %8 : vector<1x128xf32> to vector<16x128xf32>
    %96 = arith.mulf %94, %95 : vector<16x128xf32>
    %97 = vector.broadcast %9 : vector<1x128xf32> to vector<16x128xf32>
    %98 = arith.addf %96, %97 : vector<16x128xf32>
    %cst_85 = arith.constant 0.000000e+00 : f32
    %99 = vector.broadcast %cst_85 : f32 to vector<16x128xf32>
    %100 = arith.maximumf %98, %99 : vector<16x128xf32>
    %c8_86 = arith.constant 8 : index
    %c0_87 = arith.constant 0 : index
    %101 = vector.load %arg7[%c8_86, %c0_87] : memref<32x128xf32, #tpu.memory_space<vmem>>, vector<16x128xf32>
    tpu.vector_store %arg7[%c8_86, %c0_87], %100 {strides = array<i32>} : memref<32x128xf32, #tpu.memory_space<vmem>>, vector<16x128xf32>,
    %cst_88 = arith.constant 0.000000e+00 : f32
    %102 = vector.broadcast %cst_88 : f32 to vector<16x128xf32>
    %c7_89 = arith.constant 7 : index
    %c0_90 = arith.constant 0 : index
    %103 = vector.load %arg7[%c7_89, %c0_90] : memref<32x128xf32, #tpu.memory_space<vmem>>, vector<16x128xf32>
    %104 = arith.truncf %103 : vector<16x128xf32> to vector<16x128xbf16>
    %c0_91 = arith.constant 0 : index
    %c0_92 = arith.constant 0 : index
    %c0_93 = arith.constant 0 : index
    %105 = vector.load %arg3[%c0_91, %c0_92, %c0_93] : memref<3x128x128xbf16, #tpu.memory_space<vmem>>, vector<1x128x128xbf16>
    %106 = vector.shape_cast %105 : vector<1x128x128xbf16> to vector<128x128xbf16>
    %cst_94 = arith.constant dense<0.000000e+00> : vector<16x128xf32>
    %107 = tpu.matmul %104, %106, %cst_94 {dimension_numbers = #tpu.dot_dimension_numbers<[1], [0], [0], [1], [0, 0, 1, 1], [], []>} : vector<16x128xbf16>, vector<128x128xbf16>, vector<16x128xf32> -> vector<16x128xf32>
    %108 = arith.addf %102, %107 : vector<16x128xf32>
    %c8_95 = arith.constant 8 : index
    %c0_96 = arith.constant 0 : index
    %109 = vector.load %arg7[%c8_95, %c0_96] : memref<32x128xf32, #tpu.memory_space<vmem>>, vector<16x128xf32>
    %110 = arith.truncf %109 : vector<16x128xf32> to vector<16x128xbf16>
    %c1_97 = arith.constant 1 : index
    %c0_98 = arith.constant 0 : index
    %c0_99 = arith.constant 0 : index
    %111 = vector.load %arg3[%c1_97, %c0_98, %c0_99] : memref<3x128x128xbf16, #tpu.memory_space<vmem>>, vector<1x128x128xbf16>
    %112 = vector.shape_cast %111 : vector<1x128x128xbf16> to vector<128x128xbf16>
    %cst_100 = arith.constant dense<0.000000e+00> : vector<16x128xf32>
    %113 = tpu.matmul %110, %112, %cst_100 {dimension_numbers = #tpu.dot_dimension_numbers<[1], [0], [0], [1], [0, 0, 1, 1], [], []>} : vector<16x128xbf16>, vector<128x128xbf16>, vector<16x128xf32> -> vector<16x128xf32>
    %114 = arith.addf %108, %113 : vector<16x128xf32>
    %c9_101 = arith.constant 9 : index
    %c0_102 = arith.constant 0 : index
    %115 = vector.load %arg7[%c9_101, %c0_102] : memref<32x128xf32, #tpu.memory_space<vmem>>, vector<16x128xf32>
    %116 = arith.truncf %115 : vector<16x128xf32> to vector<16x128xbf16>
    %c2_103 = arith.constant 2 : index
    %c0_104 = arith.constant 0 : index
    %c0_105 = arith.constant 0 : index
    %117 = vector.load %arg3[%c2_103, %c0_104, %c0_105] : memref<3x128x128xbf16, #tpu.memory_space<vmem>>, vector<1x128x128xbf16>
    %118 = vector.shape_cast %117 : vector<1x128x128xbf16> to vector<128x128xbf16>
    %cst_106 = arith.constant dense<0.000000e+00> : vector<16x128xf32>
    %119 = tpu.matmul %116, %118, %cst_106 {dimension_numbers = #tpu.dot_dimension_numbers<[1], [0], [0], [1], [0, 0, 1, 1], [], []>} : vector<16x128xbf16>, vector<128x128xbf16>, vector<16x128xf32> -> vector<16x128xf32>
    %120 = arith.addf %114, %119 : vector<16x128xf32>
    %121 = vector.broadcast %10 : vector<1x128xf32> to vector<16x128xf32>
    %122 = arith.mulf %120, %121 : vector<16x128xf32>
    %123 = vector.broadcast %11 : vector<1x128xf32> to vector<16x128xf32>
    %124 = arith.addf %122, %123 : vector<16x128xf32>
    %125 = arith.extf %73 : vector<16x128xbf16> to vector<16x128xf32>
    %126 = arith.addf %124, %125 : vector<16x128xf32>
    %cst_107 = arith.constant 0.000000e+00 : f32
    %127 = vector.broadcast %cst_107 : f32 to vector<16x128xf32>
    %128 = arith.maximumf %126, %127 : vector<16x128xf32>
    %c1_108 = arith.constant 1 : index
    %c0_109 = arith.constant 0 : index
    %c0_110 = arith.constant 0 : index
    %129 = vector.load %arg5[%c1_108, %c0_109, %c0_110] : memref<2x16x128xf32, #tpu.memory_space<vmem>>, vector<1x16x128xf32>
    %130 = vector.shape_cast %129 : vector<1x16x128xf32> to vector<16x128xf32>
    %131 = vector.shape_cast %128 : vector<16x128xf32> to vector<1x16x128xf32>
    tpu.vector_store %arg5[%c1_108, %c0_109, %c0_110], %131 {strides = array<i32>} : memref<2x16x128xf32, #tpu.memory_space<vmem>>, vector<1x16x128xf32>,
    return
  }
  func.func @transform_0(%arg0: i32) -> (i32, i32, i32) {
    %c0_i32 = arith.constant 0 : i32
    %c0_i32_0 = arith.constant 0 : i32
    %c0_i32_1 = arith.constant 0 : i32
    return %arg0, %c0_i32, %c0_i32_0 : i32, i32, i32
  }
  func.func @transform_1(%arg0: i32) -> (i32, i32, i32) {
    %c0_i32 = arith.constant 0 : i32
    %c0_i32_0 = arith.constant 0 : i32
    %c0_i32_1 = arith.constant 0 : i32
    %c0_i32_2 = arith.constant 0 : i32
    return %c0_i32, %c0_i32_0, %c0_i32_1 : i32, i32, i32
  }
  func.func @transform_2(%arg0: i32) -> (i32, i32, i32) {
    %c0_i32 = arith.constant 0 : i32
    %c0_i32_0 = arith.constant 0 : i32
    %c0_i32_1 = arith.constant 0 : i32
    %c0_i32_2 = arith.constant 0 : i32
    return %c0_i32, %c0_i32_0, %c0_i32_1 : i32, i32, i32
  }
  func.func @transform_3(%arg0: i32) -> (i32, i32) {
    %c0_i32 = arith.constant 0 : i32
    %c0_i32_0 = arith.constant 0 : i32
    %c0_i32_1 = arith.constant 0 : i32
    return %c0_i32, %c0_i32_0 : i32, i32
  }
  func.func @transform_4(%arg0: i32) -> (i32, i32, i32) {
    %c0_i32 = arith.constant 0 : i32
    %c0_i32_0 = arith.constant 0 : i32
    %c0_i32_1 = arith.constant 0 : i32
    return %arg0, %c0_i32, %c0_i32_0 : i32, i32, i32
  }
}

</mosaic_0001>

<llo_original>
// kernel: tpu_custom_call.1
$region0: #{tpu_custom_call.1}
  #allocation0 [shape = 'u32[]', space=smem, size = 0x4, offset = 0x4, fixed_abs, tag = 'smem constant byte address 0x4 - core index']
  #allocation1 [shape = 'u32[144,128]{1,0:T(1,128)}', space=vmem, size = 0x12000, scoped, tag = 'internal scratch']
  #allocation2 [shape = 'f32[32,128]{1,0:T(8,128)}', space=vmem, size = 0x4000, scoped, tag = 'scratch operand']
  #allocation3 [shape = 'f32[32,128]{1,0:T(8,128)}', space=vmem, size = 0x4000, scoped, tag = 'scratch operand']
  %s0 = inlined_call_operand.hbm [shape: bf16[2,16,128], index: 0, kind: input, shape index: {}]
  %s1 = inlined_call_operand.hbm [shape: bf16[3,128,128], index: 1, kind: input, shape index: {}]
  %s2 = inlined_call_operand.hbm [shape: bf16[3,128,128], index: 2, kind: input, shape index: {}]
  %s3 = inlined_call_operand.vmem [shape: f32[4,128], index: 3, kind: input, shape index: {}]
  %s4 = inlined_call_operand.hbm [shape: f32[2,16,128], index: 4, kind: output, shape index: {}]
  %s5 = sld [smem:[#allocation0]]
  $region38: #{tpu_custom_call.1} parent=0
    _
  %s7 = ssub.s32 1, %s5
  %s8 = scalar_select 0, %s7, %s5
  $region1: #{tpu_custom_call.1} parent=0
    #allocation4 [shape = 'u8[8192]{0}', space=vmem, size = 0x2000, scoped, tag = 'input window, operand 0, single buffered']
    #allocation5 [shape = 's32[1]{0}', space=sflag, size = 0x4, scoped, tag = 'scoped memory for tpu_custom_call.1']
    #allocation6 [shape = 's32[1]{0}', space=sflag, size = 0x4, scoped, tag = 'scoped memory for tpu_custom_call.1']
    #allocation7 [shape = 'u8[98304]{0}', space=vmem, size = 0x18000, scoped, tag = 'input window, operand 1, single buffered']
    #allocation8 [shape = 's32[1]{0}', space=sflag, size = 0x4, scoped, tag = 'scoped memory for tpu_custom_call.1']
    #allocation9 [shape = 'u8[98304]{0}', space=vmem, size = 0x18000, scoped, tag = 'input window, operand 2, single buffered']
    #allocation10 [shape = 'u8[16384]{0}', space=vmem, size = 0x4000, scoped, tag = 'output window, operand 0, single buffered']
    %9 = vsyncpa [#allocation5], 0
    %10 = vsyncpa [#allocation8], 0
    %11 = vsyncpa [#allocation6], 0
    // Predicated region
    $region2: #{tpu_custom_call.1} parent=1 // pred_check
      _
    $region3: #{tpu_custom_call.1} parent=1 // pred_check_branch
      %13 = sbr.rel (0) target = $region5
    $region4: #{tpu_custom_call.1} parent=1 // pred_region
      %s15 = ssub.s32 256, 256
      %16 = vsyncadd [#allocation5], %s15
      %s17 = sshll.u32 [#allocation4], 4
      %s18 = int_to_ptr.vmem [resolvable:$true] %s17
      %23 = dma.hbm_to_vmem [thread:$0]  %s0, 256, %s18, [#allocation5], 64, 64, 4
    $region5: #{tpu_custom_call.1} parent=1 // pred_fallthru
      _
    // Predicated region
    $region6: #{tpu_custom_call.1} parent=1 // pred_check
      _
    $region7: #{tpu_custom_call.1} parent=1 // pred_check_branch
      %25 = sbr.rel (0) target = $region9
    $region8: #{tpu_custom_call.1} parent=1 // pred_region
      %s27 = ssub.s32 3072, 3072
      %28 = vsyncadd [#allocation8], %s27
      %s29 = sshll.u32 [#allocation7], 4
      %s30 = int_to_ptr.vmem [resolvable:$true] %s29
      %35 = dma.hbm_to_vmem [thread:$0]  %s1, 3072, %s30, [#allocation8], 64, 64, 4
    $region9: #{tpu_custom_call.1} parent=1 // pred_fallthru
      _
    // Predicated region
    $region10: #{tpu_custom_call.1} parent=1 // pred_check
      _
    $region11: #{tpu_custom_call.1} parent=1 // pred_check_branch
      %37 = sbr.rel (0) target = $region13
    $region12: #{tpu_custom_call.1} parent=1 // pred_region
      %s39 = ssub.s32 3072, 3072
      %40 = vsyncadd [#allocation8], %s39
      %s41 = sshll.u32 [#allocation9], 4
      %s42 = int_to_ptr.vmem [resolvable:$true] %s41
      %47 = dma.hbm_to_vmem [thread:$0]  %s2, 3072, %s42, [#allocation8], 64, 64, 4
    $region13: #{tpu_custom_call.1} parent=1 // pred_fallthru
      _
    // Predicated region
    $region14: #{tpu_custom_call.1} parent=1 // pred_check
      _
    $region15: #{tpu_custom_call.1} parent=1 // pred_check_branch
      %49 = sbr.rel (0) target = $region17
    $region16: #{tpu_custom_call.1} parent=1 // pred_region
      _
    $region17: #{tpu_custom_call.1} parent=1 // pred_fallthru
      _
    // Predicated region
    $region18: #{tpu_custom_call.1} parent=1 // pred_check
      _
    $region19: #{tpu_custom_call.1} parent=1 // pred_check_branch
      %51 = sbr.rel (0) target = $region21
    $region20: #{tpu_custom_call.1} parent=1 // pred_region
      %52 = dma.done [#allocation5], 256
    $region21: #{tpu_custom_call.1} parent=1 // pred_fallthru
      _
    // Predicated region
    $region22: #{tpu_custom_call.1} parent=1 // pred_check
      _
    $region23: #{tpu_custom_call.1} parent=1 // pred_check_branch
      %54 = sbr.rel (0) target = $region25
    $region24: #{tpu_custom_call.1} parent=1 // pred_region
      %55 = dma.done [#allocation8], 3072
    $region25: #{tpu_custom_call.1} parent=1 // pred_fallthru
      _
    // Predicated region
    $region26: #{tpu_custom_call.1} parent=1 // pred_check
      _
    $region27: #{tpu_custom_call.1} parent=1 // pred_check_branch
      %57 = sbr.rel (0) target = $region29
    $region28: #{tpu_custom_call.1} parent=1 // pred_region
      %58 = dma.done [#allocation8], 3072
    $region29: #{tpu_custom_call.1} parent=1 // pred_fallthru
      _
    %60 = vst [vmem:[#allocation2 + $0x7] sm:$0x1] 0.0
    %61 = vst [vmem:[#allocation2 + $0x18] sm:$0x1] 0.0
    %62 = vst [vmem:[#allocation3 + $0x7] sm:$0x1] 0.0
    %63 = vst [vmem:[#allocation3 + $0x18] sm:$0x1] 0.0
    %v64 = vld [vmem:[%s3] sm:$0x1]
    %v65 = vld [vmem:[%s3 + $0x1] sm:$0x1]
    %v66 = vld [vmem:[%s3 + $0x2] sm:$0x1]
    %v67 = vld [vmem:[%s3 + $0x3] sm:$0x1]
    %v68 = vld [vmem:[#allocation4] sm:$0xf]
    %v69 = vld [vmem:[#allocation4 + $0x4] sm:$0xf]
    %v70 = vunpack.c.l.bf16 %v68
    %v71 = vunpack.c.l.bf16 %v69
    %72 = vst [vmem:[#allocation2 + $0x8] sm:$0xff] %v70
    %73 = vst [vmem:[#allocation2 + $0x10] sm:$0xff] %v71
    %v74 = vld [vmem:[#allocation2 + $0x7] sm:$0xff]
    %v75 = vld [vmem:[#allocation2 + $0xf] sm:$0xff]
    %v76 = vpack.c.bf16 %v75, %v74
    %v77 = vld [vmem:[#allocation7] sm:$0xf]
    %v78 = vld [vmem:[#allocation7 + $0x4] sm:$0xf]
    %v79 = vld [vmem:[#allocation7 + $0x8] sm:$0xf]
    %v80 = vld [vmem:[#allocation7 + $0xc] sm:$0xf]
    %v81 = vld [vmem:[#allocation7 + $0x10] sm:$0xf]
    %v82 = vld [vmem:[#allocation7 + $0x14] sm:$0xf]
    %v83 = vld [vmem:[#allocation7 + $0x18] sm:$0xf]
    %v84 = vld [vmem:[#allocation7 + $0x1c] sm:$0xf]
    %v85 = vld [vmem:[#allocation7 + $0x20] sm:$0xf]
    %v86 = vld [vmem:[#allocation7 + $0x24] sm:$0xf]
    %v87 = vld [vmem:[#allocation7 + $0x28] sm:$0xf]
    %v88 = vld [vmem:[#allocation7 + $0x2c] sm:$0xf]
    %v89 = vld [vmem:[#allocation7 + $0x30] sm:$0xf]
    %v90 = vld [vmem:[#allocation7 + $0x34] sm:$0xf]
    %v91 = vld [vmem:[#allocation7 + $0x38] sm:$0xf]
    %v92 = vld [vmem:[#allocation7 + $0x3c] sm:$0xf]
    %v93 = vld [vmem:[#allocation2 + $0x8] sm:$0xff]
    %v94 = vld [vmem:[#allocation2 + $0x10] sm:$0xff]
    %v95 = vpack.c.bf16 %v94, %v93
    %s96 = scalar_lea.vmem [#allocation7], 64
    %v97 = vld [vmem:[%s96] sm:$0xf]
    %v98 = vld [vmem:[%s96 + $0x4] sm:$0xf]
    %v99 = vld [vmem:[%s96 + $0x8] sm:$0xf]
    %v100 = vld [vmem:[%s96 + $0xc] sm:$0xf]
    %v101 = vld [vmem:[%s96 + $0x10] sm:$0xf]
    %v102 = vld [vmem:[%s96 + $0x14] sm:$0xf]
    %v103 = vld [vmem:[%s96 + $0x18] sm:$0xf]
    %v104 = vld [vmem:[%s96 + $0x1c] sm:$0xf]
    %v105 = vld [vmem:[%s96 + $0x20] sm:$0xf]
    %v106 = vld [vmem:[%s96 + $0x24] sm:$0xf]
    %v107 = vld [vmem:[%s96 + $0x28] sm:$0xf]
    %v108 = vld [vmem:[%s96 + $0x2c] sm:$0xf]
    %v109 = vld [vmem:[%s96 + $0x30] sm:$0xf]
    %v110 = vld [vmem:[%s96 + $0x34] sm:$0xf]
    %v111 = vld [vmem:[%s96 + $0x38] sm:$0xf]
    %v112 = vld [vmem:[%s96 + $0x3c] sm:$0xf]
    %v129 = vunpack.c.l.b16 %v97
    %v130 = vunpack.c.l.b16 %v98
    %v131 = vunpack.c.l.b16 %v99
    %v132 = vunpack.c.l.b16 %v100
    %v133 = vunpack.c.l.b16 %v101
    %v134 = vunpack.c.l.b16 %v102
    %v135 = vunpack.c.l.b16 %v103
    %v136 = vunpack.c.l.b16 %v104
    %v137 = vunpack.c.l.b16 %v105
    %v138 = vunpack.c.l.b16 %v106
    %v139 = vunpack.c.l.b16 %v107
    %v140 = vunpack.c.l.b16 %v108
    %v141 = vunpack.c.l.b16 %v109
    %v142 = vunpack.c.l.b16 %v110
    %v143 = vunpack.c.l.b16 %v111
    %v144 = vunpack.c.l.b16 %v112
    %v145 = vpack.c.b16 %v130, %v129
    %v146 = vpack.c.b16 %v132, %v131
    %v147 = vpack.c.b16 %v134, %v133
    %v148 = vpack.c.b16 %v136, %v135
    %v149 = vpack.c.b16 %v138, %v137
    %v150 = vpack.c.b16 %v140, %v139
    %v151 = vpack.c.b16 %v142, %v141
    %v152 = vpack.c.b16 %v144, %v143
    %161 = vmatprep.subr.bf16.mxu0 0
    %162 = vmatpush1.bf16.msra.mxu0 %v145
    %163 = vmatprep.subr.bf16.mxu0 0
    %164 = vmatpush1.bf16.msra.mxu0 %v146
    %165 = vmatprep.subr.bf16.mxu0 0
    %166 = vmatpush1.bf16.msra.mxu0 %v147
    %167 = vmatprep.subr.bf16.mxu0 0
    %168 = vmatpush1.bf16.msra.mxu0 %v148
    %169 = vmatprep.subr.bf16.mxu0 0
    %170 = vmatpush1.bf16.msra.mxu0 %v149
    %171 = vmatprep.subr.bf16.mxu0 0
    %172 = vmatpush1.bf16.msra.mxu0 %v150
    %173 = vmatprep.subr.bf16.mxu0 0
    %174 = vmatpush1.bf16.msra.mxu0 %v151
    %175 = vmatprep.subr.bf16.mxu0 0
    %176 = vmatpush1.bf16.msra.mxu0 %v152
    %177 = vmatprep.subr.bf16.mxu0 0
    %178 = vmatpush1.bf16.msra.mxu0 0
    %179 = vmatprep.subr.bf16.mxu0 0
    %180 = vmatpush1.bf16.msra.mxu0 0
    %181 = vmatprep.subr.bf16.mxu0 0
    %182 = vmatpush1.bf16.msra.mxu0 0
    %183 = vmatprep.subr.bf16.mxu0 0
    %184 = vmatpush1.bf16.msra.mxu0 0
    %185 = vmatprep.subr.bf16.mxu0 0
    %186 = vmatpush1.bf16.msra.mxu0 0
    %187 = vmatprep.subr.bf16.mxu0 0
    %188 = vmatpush1.bf16.msra.mxu0 0
    %189 = vmatprep.subr.bf16.mxu0 0
    %190 = vmatpush1.bf16.msra.mxu0 0
    %191 = vmatprep.subr.bf16.mxu0 0
    %192 = vmatpush1.bf16.msra.mxu0 0
    %193 = vmatprep.mubr.bf16.mxu0 0
    %194 = vmatmul.mubr.bf16.gmra.mrb[0].mxu0 %v95
    %v195 = vpop.f32.mrb[0].mxu0
    %v196 = vadd.f32 0.0, %v195
    %v197 = vpop.f32.mrb[0].mxu0
    %v198 = vpop.f32.mrb[0].mxu0
    %v199 = vadd.f32 0.0, %v198
    %v200 = vpop.f32.mrb[0].mxu0
    %201 = vdwg.mxu0
    %v218 = vunpack.c.l.b16 %v77
    %v219 = vunpack.c.l.b16 %v78
    %v220 = vunpack.c.l.b16 %v79
    %v221 = vunpack.c.l.b16 %v80
    %v222 = vunpack.c.l.b16 %v81
    %v223 = vunpack.c.l.b16 %v82
    %v224 = vunpack.c.l.b16 %v83
    %v225 = vunpack.c.l.b16 %v84
    %v226 = vunpack.c.l.b16 %v85
    %v227 = vunpack.c.l.b16 %v86
    %v228 = vunpack.c.l.b16 %v87
    %v229 = vunpack.c.l.b16 %v88
    %v230 = vunpack.c.l.b16 %v89
    %v231 = vunpack.c.l.b16 %v90
    %v232 = vunpack.c.l.b16 %v91
    %v233 = vunpack.c.l.b16 %v92
    %v234 = vpack.c.b16 %v219, %v218
    %v235 = vpack.c.b16 %v221, %v220
    %v236 = vpack.c.b16 %v223, %v222
    %v237 = vpack.c.b16 %v225, %v224
    %v238 = vpack.c.b16 %v227, %v226
    %v239 = vpack.c.b16 %v229, %v228
    %v240 = vpack.c.b16 %v231, %v230
    %v241 = vpack.c.b16 %v233, %v232
    %250 = vmatprep.subr.bf16.mxu0 0
    %251 = vmatpush1.bf16.msra.mxu0 %v234
    %252 = vmatprep.subr.bf16.mxu0 0
    %253 = vmatpush1.bf16.msra.mxu0 %v235
    %254 = vmatprep.subr.bf16.mxu0 0
    %255 = vmatpush1.bf16.msra.mxu0 %v236
    %256 = vmatprep.subr.bf16.mxu0 0
    %257 = vmatpush1.bf16.msra.mxu0 %v237
    %258 = vmatprep.subr.bf16.mxu0 0
    %259 = vmatpush1.bf16.msra.mxu0 %v238
    %260 = vmatprep.subr.bf16.mxu0 0
    %261 = vmatpush1.bf16.msra.mxu0 %v239
    %262 = vmatprep.subr.bf16.mxu0 0
    %263 = vmatpush1.bf16.msra.mxu0 %v240
    %264 = vmatprep.subr.bf16.mxu0 0
    %265 = vmatpush1.bf16.msra.mxu0 %v241
    %266 = vmatprep.subr.bf16.mxu0 0
    %267 = vmatpush1.bf16.msra.mxu0 0
    %268 = vmatprep.subr.bf16.mxu0 0
    %269 = vmatpush1.bf16.msra.mxu0 0
    %270 = vmatprep.subr.bf16.mxu0 0
    %271 = vmatpush1.bf16.msra.mxu0 0
    %272 = vmatprep.subr.bf16.mxu0 0
    %273 = vmatpush1.bf16.msra.mxu0 0
    %274 = vmatprep.subr.bf16.mxu0 0
    %275 = vmatpush1.bf16.msra.mxu0 0
    %276 = vmatprep.subr.bf16.mxu0 0
    %277 = vmatpush1.bf16.msra.mxu0 0
    %278 = vmatprep.subr.bf16.mxu0 0
    %279 = vmatpush1.bf16.msra.mxu0 0
    %280 = vmatprep.subr.bf16.mxu0 0
    %281 = vmatpush1.bf16.msra.mxu0 0
    %282 = vmatprep.mubr.bf16.mxu0 0
    %283 = vmatmul.mubr.bf16.gmra.mrb[0].mxu0 %v76
    %v284 = vpop.f32.mrb[0].mxu0
    %v285 = vadd.f32 %v196, %v284
    %v286 = vpop.f32.mrb[0].mxu0
    %v287 = vpop.f32.mrb[0].mxu0
    %v288 = vadd.f32 %v199, %v287
    %v289 = vpop.f32.mrb[0].mxu0
    %290 = vdwg.mxu0
    %v291 = vld [vmem:[#allocation2 + $0x9] sm:$0xff]
    %v292 = vld [vmem:[#allocation2 + $0x11] sm:$0xff]
    %v293 = vpack.c.bf16 %v292, %v291
    %s294 = scalar_lea.vmem [#allocation7], 128
    %v295 = vld [vmem:[%s294] sm:$0xf]
    %v296 = vld [vmem:[%s294 + $0x4] sm:$0xf]
    %v297 = vld [vmem:[%s294 + $0x8] sm:$0xf]
    %v298 = vld [vmem:[%s294 + $0xc] sm:$0xf]
    %v299 = vld [vmem:[%s294 + $0x10] sm:$0xf]
    %v300 = vld [vmem:[%s294 + $0x14] sm:$0xf]
    %v301 = vld [vmem:[%s294 + $0x18] sm:$0xf]
    %v302 = vld [vmem:[%s294 + $0x1c] sm:$0xf]
    %v303 = vld [vmem:[%s294 + $0x20] sm:$0xf]
    %v304 = vld [vmem:[%s294 + $0x24] sm:$0xf]
    %v305 = vld [vmem:[%s294 + $0x28] sm:$0xf]
    %v306 = vld [vmem:[%s294 + $0x2c] sm:$0xf]
    %v307 = vld [vmem:[%s294 + $0x30] sm:$0xf]
    %v308 = vld [vmem:[%s294 + $0x34] sm:$0xf]
    %v309 = vld [vmem:[%s294 + $0x38] sm:$0xf]
    %v310 = vld [vmem:[%s294 + $0x3c] sm:$0xf]
    %v327 = vunpack.c.l.b16 %v295
    %v328 = vunpack.c.l.b16 %v296
    %v329 = vunpack.c.l.b16 %v297
    %v330 = vunpack.c.l.b16 %v298
    %v331 = vunpack.c.l.b16 %v299
    %v332 = vunpack.c.l.b16 %v300
    %v333 = vunpack.c.l.b16 %v301
    %v334 = vunpack.c.l.b16 %v302
    %v335 = vunpack.c.l.b16 %v303
    %v336 = vunpack.c.l.b16 %v304
    %v337 = vunpack.c.l.b16 %v305
    %v338 = vunpack.c.l.b16 %v306
    %v339 = vunpack.c.l.b16 %v307
    %v340 = vunpack.c.l.b16 %v308
    %v341 = vunpack.c.l.b16 %v309
    %v342 = vunpack.c.l.b16 %v310
    %v343 = vpack.c.b16 %v328, %v327
    %v344 = vpack.c.b16 %v330, %v329
    %v345 = vpack.c.b16 %v332, %v331
    %v346 = vpack.c.b16 %v334, %v333
    %v347 = vpack.c.b16 %v336, %v335
    %v348 = vpack.c.b16 %v338, %v337
    %v349 = vpack.c.b16 %v340, %v339
    %v350 = vpack.c.b16 %v342, %v341
    %359 = vmatprep.subr.bf16.mxu0 0
    %360 = vmatpush1.bf16.msra.mxu0 %v343
    %361 = vmatprep.subr.bf16.mxu0 0
    %362 = vmatpush1.bf16.msra.mxu0 %v344
    %363 = vmatprep.subr.bf16.mxu0 0
    %364 = vmatpush1.bf16.msra.mxu0 %v345
    %365 = vmatprep.subr.bf16.mxu0 0
    %366 = vmatpush1.bf16.msra.mxu0 %v346
    %367 = vmatprep.subr.bf16.mxu0 0
    %368 = vmatpush1.bf16.msra.mxu0 %v347
    %369 = vmatprep.subr.bf16.mxu0 0
    %370 = vmatpush1.bf16.msra.mxu0 %v348
    %371 = vmatprep.subr.bf16.mxu0 0
    %372 = vmatpush1.bf16.msra.mxu0 %v349
    %373 = vmatprep.subr.bf16.mxu0 0
    %374 = vmatpush1.bf16.msra.mxu0 %v350
    %375 = vmatprep.subr.bf16.mxu0 0
    %376 = vmatpush1.bf16.msra.mxu0 0
    %377 = vmatprep.subr.bf16.mxu0 0
    %378 = vmatpush1.bf16.msra.mxu0 0
    %379 = vmatprep.subr.bf16.mxu0 0
    %380 = vmatpush1.bf16.msra.mxu0 0
    %381 = vmatprep.subr.bf16.mxu0 0
    %382 = vmatpush1.bf16.msra.mxu0 0
    %383 = vmatprep.subr.bf16.mxu0 0
    %384 = vmatpush1.bf16.msra.mxu0 0
    %385 = vmatprep.subr.bf16.mxu0 0
    %386 = vmatpush1.bf16.msra.mxu0 0
    %387 = vmatprep.subr.bf16.mxu0 0
    %388 = vmatpush1.bf16.msra.mxu0 0
    %389 = vmatprep.subr.bf16.mxu0 0
    %390 = vmatpush1.bf16.msra.mxu0 0
    %391 = vmatprep.mubr.bf16.mxu0 0
    %392 = vmatmul.mubr.bf16.gmra.mrb[0].mxu0 %v293
    %v393 = vpop.f32.mrb[0].mxu0
    %v394 = vadd.f32 0.0, %v393
    %v395 = vpop.f32.mrb[0].mxu0
    %v396 = vpop.f32.mrb[0].mxu0
    %v397 = vadd.f32 0.0, %v396
    %v398 = vpop.f32.mrb[0].mxu0
    %399 = vdwg.mxu0
    %v400 = vadd.f32 %v285, %v394
    %v401 = vadd.f32 %v288, %v397
    %v402 = vlaneseq
    %v403 = vshrl.u32 %v402, 7
    %v404 = vsub.s32 0, %v403
    %v405 = vrot.slane %v64, %v404
    %v406 = vmul.f32 %v400, %v405
    %v407 = vmul.f32 %v401, %v405
    %v408 = vlaneseq
    %v409 = vshrl.u32 %v408, 7
    %v410 = vsub.s32 0, %v409
    %v411 = vrot.slane %v65, %v410
    %v412 = vadd.f32 %v406, %v411
    %v413 = vadd.f32 %v407, %v411
    %v414 = vmax.f32 %v412, 0.0
    %v415 = vmax.f32 %v413, 0.0
    %416 = vst [vmem:[#allocation3 + $0x8] sm:$0xff] %v414
    %417 = vst [vmem:[#allocation3 + $0x10] sm:$0xff] %v415
    %v418 = vld [vmem:[#allocation3 + $0x7] sm:$0xff]
    %v419 = vld [vmem:[#allocation3 + $0xf] sm:$0xff]
    %v420 = vpack.c.bf16 %v419, %v418
    %v421 = vld [vmem:[#allocation9] sm:$0xf]
    %v422 = vld [vmem:[#allocation9 + $0x4] sm:$0xf]
    %v423 = vld [vmem:[#allocation9 + $0x8] sm:$0xf]
    %v424 = vld [vmem:[#allocation9 + $0xc] sm:$0xf]
    %v425 = vld [vmem:[#allocation9 + $0x10] sm:$0xf]
    %v426 = vld [vmem:[#allocation9 + $0x14] sm:$0xf]
    %v427 = vld [vmem:[#allocation9 + $0x18] sm:$0xf]
    %v428 = vld [vmem:[#allocation9 + $0x1c] sm:$0xf]
    %v429 = vld [vmem:[#allocation9 + $0x20] sm:$0xf]
    %v430 = vld [vmem:[#allocation9 + $0x24] sm:$0xf]
    %v431 = vld [vmem:[#allocation9 + $0x28] sm:$0xf]
    %v432 = vld [vmem:[#allocation9 + $0x2c] sm:$0xf]
    %v433 = vld [vmem:[#allocation9 + $0x30] sm:$0xf]
    %v434 = vld [vmem:[#allocation9 + $0x34] sm:$0xf]
    %v435 = vld [vmem:[#allocation9 + $0x38] sm:$0xf]
    %v436 = vld [vmem:[#allocation9 + $0x3c] sm:$0xf]
    %v437 = vld [vmem:[#allocation3 + $0x8] sm:$0xff]
    %v438 = vld [vmem:[#allocation3 + $0x10] sm:$0xff]
    %v439 = vpack.c.bf16 %v438, %v437
    %s440 = scalar_lea.vmem [#allocation9], 64
    %v441 = vld [vmem:[%s440] sm:$0xf]
    %v442 = vld [vmem:[%s440 + $0x4] sm:$0xf]
    %v443 = vld [vmem:[%s440 + $0x8] sm:$0xf]
    %v444 = vld [vmem:[%s440 + $0xc] sm:$0xf]
    %v445 = vld [vmem:[%s440 + $0x10] sm:$0xf]
    %v446 = vld [vmem:[%s440 + $0x14] sm:$0xf]
    %v447 = vld [vmem:[%s440 + $0x18] sm:$0xf]
    %v448 = vld [vmem:[%s440 + $0x1c] sm:$0xf]
    %v449 = vld [vmem:[%s440 + $0x20] sm:$0xf]
    %v450 = vld [vmem:[%s440 + $0x24] sm:$0xf]
    %v451 = vld [vmem:[%s440 + $0x28] sm:$0xf]
    %v452 = vld [vmem:[%s440 + $0x2c] sm:$0xf]
    %v453 = vld [vmem:[%s440 + $0x30] sm:$0xf]
    %v454 = vld [vmem:[%s440 + $0x34] sm:$0xf]
    %v455 = vld [vmem:[%s440 + $0x38] sm:$0xf]
    %v456 = vld [vmem:[%s440 + $0x3c] sm:$0xf]
    %v473 = vunpack.c.l.b16 %v441
    %v474 = vunpack.c.l.b16 %v442
    %v475 = vunpack.c.l.b16 %v443
    %v476 = vunpack.c.l.b16 %v444
    %v477 = vunpack.c.l.b16 %v445
    %v478 = vunpack.c.l.b16 %v446
    %v479 = vunpack.c.l.b16 %v447
    %v480 = vunpack.c.l.b16 %v448
    %v481 = vunpack.c.l.b16 %v449
    %v482 = vunpack.c.l.b16 %v450
    %v483 = vunpack.c.l.b16 %v451
    %v484 = vunpack.c.l.b16 %v452
    %v485 = vunpack.c.l.b16 %v453
    %v486 = vunpack.c.l.b16 %v454
    %v487 = vunpack.c.l.b16 %v455
    %v488 = vunpack.c.l.b16 %v456
    %v489 = vpack.c.b16 %v474, %v473
    %v490 = vpack.c.b16 %v476, %v475
    %v491 = vpack.c.b16 %v478, %v477
    %v492 = vpack.c.b16 %v480, %v479
    %v493 = vpack.c.b16 %v482, %v481
    %v494 = vpack.c.b16 %v484, %v483
    %v495 = vpack.c.b16 %v486, %v485
    %v496 = vpack.c.b16 %v488, %v487
    %505 = vmatprep.subr.bf16.mxu0 0
    %506 = vmatpush1.bf16.msra.mxu0 %v489
    %507 = vmatprep.subr.bf16.mxu0 0
    %508 = vmatpush1.bf16.msra.mxu0 %v490
    %509 = vmatprep.subr.bf16.mxu0 0
    %510 = vmatpush1.bf16.msra.mxu0 %v491
    %511 = vmatprep.subr.bf16.mxu0 0
    %512 = vmatpush1.bf16.msra.mxu0 %v492
    %513 = vmatprep.subr.bf16.mxu0 0
    %514 = vmatpush1.bf16.msra.mxu0 %v493
    %515 = vmatprep.subr.bf16.mxu0 0
    %516 = vmatpush1.bf16.msra.mxu0 %v494
    %517 = vmatprep.subr.bf16.mxu0 0
    %518 = vmatpush1.bf16.msra.mxu0 %v495
    %519 = vmatprep.subr.bf16.mxu0 0
    %520 = vmatpush1.bf16.msra.mxu0 %v496
    %521 = vmatprep.subr.bf16.mxu0 0
    %522 = vmatpush1.bf16.msra.mxu0 0
    %523 = vmatprep.subr.bf16.mxu0 0
    %524 = vmatpush1.bf16.msra.mxu0 0
    %525 = vmatprep.subr.bf16.mxu0 0
    %526 = vmatpush1.bf16.msra.mxu0 0
    %527 = vmatprep.subr.bf16.mxu0 0
    %528 = vmatpush1.bf16.msra.mxu0 0
    %529 = vmatprep.subr.bf16.mxu0 0
    %530 = vmatpush1.bf16.msra.mxu0 0
    %531 = vmatprep.subr.bf16.mxu0 0
    %532 = vmatpush1.bf16.msra.mxu0 0
    %533 = vmatprep.subr.bf16.mxu0 0
    %534 = vmatpush1.bf16.msra.mxu0 0
    %535 = vmatprep.subr.bf16.mxu0 0
    %536 = vmatpush1.bf16.msra.mxu0 0
    %537 = vmatprep.mubr.bf16.mxu0 0
    %538 = vmatmul.mubr.bf16.gmra.mrb[0].mxu0 %v439
    %v539 = vpop.f32.mrb[0].mxu0
    %v540 = vadd.f32 0.0, %v539
    %v541 = vpop.f32.mrb[0].mxu0
    %v542 = vpop.f32.mrb[0].mxu0
    %v543 = vadd.f32 0.0, %v542
    %v544 = vpop.f32.mrb[0].mxu0
    %545 = vdwg.mxu0
    %v562 = vunpack.c.l.b16 %v421
    %v563 = vunpack.c.l.b16 %v422
    %v564 = vunpack.c.l.b16 %v423
    %v565 = vunpack.c.l.b16 %v424
    %v566 = vunpack.c.l.b16 %v425
    %v567 = vunpack.c.l.b16 %v426
    %v568 = vunpack.c.l.b16 %v427
    %v569 = vunpack.c.l.b16 %v428
    %v570 = vunpack.c.l.b16 %v429
    %v571 = vunpack.c.l.b16 %v430
    %v572 = vunpack.c.l.b16 %v431
    %v573 = vunpack.c.l.b16 %v432
    %v574 = vunpack.c.l.b16 %v433
    %v575 = vunpack.c.l.b16 %v434
    %v576 = vunpack.c.l.b16 %v435
    %v577 = vunpack.c.l.b16 %v436
    %v578 = vpack.c.b16 %v563, %v562
    %v579 = vpack.c.b16 %v565, %v564
    %v580 = vpack.c.b16 %v567, %v566
    %v581 = vpack.c.b16 %v569, %v568
    %v582 = vpack.c.b16 %v571, %v570
    %v583 = vpack.c.b16 %v573, %v572
    %v584 = vpack.c.b16 %v575, %v574
    %v585 = vpack.c.b16 %v577, %v576
    %594 = vmatprep.subr.bf16.mxu0 0
    %595 = vmatpush1.bf16.msra.mxu0 %v578
    %596 = vmatprep.subr.bf16.mxu0 0
    %597 = vmatpush1.bf16.msra.mxu0 %v579
    %598 = vmatprep.subr.bf16.mxu0 0
    %599 = vmatpush1.bf16.msra.mxu0 %v580
    %600 = vmatprep.subr.bf16.mxu0 0
    %601 = vmatpush1.bf16.msra.mxu0 %v581
    %602 = vmatprep.subr.bf16.mxu0 0
    %603 = vmatpush1.bf16.msra.mxu0 %v582
    %604 = vmatprep.subr.bf16.mxu0 0
    %605 = vmatpush1.bf16.msra.mxu0 %v583
    %606 = vmatprep.subr.bf16.mxu0 0
    %607 = vmatpush1.bf16.msra.mxu0 %v584
    %608 = vmatprep.subr.bf16.mxu0 0
    %609 = vmatpush1.bf16.msra.mxu0 %v585
    %610 = vmatprep.subr.bf16.mxu0 0
    %611 = vmatpush1.bf16.msra.mxu0 0
    %612 = vmatprep.subr.bf16.mxu0 0
    %613 = vmatpush1.bf16.msra.mxu0 0
    %614 = vmatprep.subr.bf16.mxu0 0
    %615 = vmatpush1.bf16.msra.mxu0 0
    %616 = vmatprep.subr.bf16.mxu0 0
    %617 = vmatpush1.bf16.msra.mxu0 0
    %618 = vmatprep.subr.bf16.mxu0 0
    %619 = vmatpush1.bf16.msra.mxu0 0
    %620 = vmatprep.subr.bf16.mxu0 0
    %621 = vmatpush1.bf16.msra.mxu0 0
    %622 = vmatprep.subr.bf16.mxu0 0
    %623 = vmatpush1.bf16.msra.mxu0 0
    %624 = vmatprep.subr.bf16.mxu0 0
    %625 = vmatpush1.bf16.msra.mxu0 0
    %626 = vmatprep.mubr.bf16.mxu0 0
    %627 = vmatmul.mubr.bf16.gmra.mrb[0].mxu0 %v420
    %v628 = vpop.f32.mrb[0].mxu0
    %v629 = vadd.f32 %v540, %v628
    %v630 = vpop.f32.mrb[0].mxu0
    %v631 = vpop.f32.mrb[0].mxu0
    %v632 = vadd.f32 %v543, %v631
    %v633 = vpop.f32.mrb[0].mxu0
    %634 = vdwg.mxu0
    %v635 = vld [vmem:[#allocation3 + $0x9] sm:$0xff]
    %v636 = vld [vmem:[#allocation3 + $0x11] sm:$0xff]
    %v637 = vpack.c.bf16 %v636, %v635
    %s638 = scalar_lea.vmem [#allocation9], 128
    %v639 = vld [vmem:[%s638] sm:$0xf]
    %v640 = vld [vmem:[%s638 + $0x4] sm:$0xf]
    %v641 = vld [vmem:[%s638 + $0x8] sm:$0xf]
    %v642 = vld [vmem:[%s638 + $0xc] sm:$0xf]
    %v643 = vld [vmem:[%s638 + $0x10] sm:$0xf]
    %v644 = vld [vmem:[%s638 + $0x14] sm:$0xf]
    %v645 = vld [vmem:[%s638 + $0x18] sm:$0xf]
    %v646 = vld [vmem:[%s638 + $0x1c] sm:$0xf]
    %v647 = vld [vmem:[%s638 + $0x20] sm:$0xf]
    %v648 = vld [vmem:[%s638 + $0x24] sm:$0xf]
    %v649 = vld [vmem:[%s638 + $0x28] sm:$0xf]
    %v650 = vld [vmem:[%s638 + $0x2c] sm:$0xf]
    %v651 = vld [vmem:[%s638 + $0x30] sm:$0xf]
    %v652 = vld [vmem:[%s638 + $0x34] sm:$0xf]
    %v653 = vld [vmem:[%s638 + $0x38] sm:$0xf]
    %v654 = vld [vmem:[%s638 + $0x3c] sm:$0xf]
    %v671 = vunpack.c.l.b16 %v639
    %v672 = vunpack.c.l.b16 %v640
    %v673 = vunpack.c.l.b16 %v641
    %v674 = vunpack.c.l.b16 %v642
    %v675 = vunpack.c.l.b16 %v643
    %v676 = vunpack.c.l.b16 %v644
    %v677 = vunpack.c.l.b16 %v645
    %v678 = vunpack.c.l.b16 %v646
    %v679 = vunpack.c.l.b16 %v647
    %v680 = vunpack.c.l.b16 %v648
    %v681 = vunpack.c.l.b16 %v649
    %v682 = vunpack.c.l.b16 %v650
    %v683 = vunpack.c.l.b16 %v651
    %v684 = vunpack.c.l.b16 %v652
    %v685 = vunpack.c.l.b16 %v653
    %v686 = vunpack.c.l.b16 %v654
    %v687 = vpack.c.b16 %v672, %v671
    %v688 = vpack.c.b16 %v674, %v673
    %v689 = vpack.c.b16 %v676, %v675
    %v690 = vpack.c.b16 %v678, %v677
    %v691 = vpack.c.b16 %v680, %v679
    %v692 = vpack.c.b16 %v682, %v681
    %v693 = vpack.c.b16 %v684, %v683
    %v694 = vpack.c.b16 %v686, %v685
    %703 = vmatprep.subr.bf16.mxu0 0
    %704 = vmatpush1.bf16.msra.mxu0 %v687
    %705 = vmatprep.subr.bf16.mxu0 0
    %706 = vmatpush1.bf16.msra.mxu0 %v688
    %707 = vmatprep.subr.bf16.mxu0 0
    %708 = vmatpush1.bf16.msra.mxu0 %v689
    %709 = vmatprep.subr.bf16.mxu0 0
    %710 = vmatpush1.bf16.msra.mxu0 %v690
    %711 = vmatprep.subr.bf16.mxu0 0
    %712 = vmatpush1.bf16.msra.mxu0 %v691
    %713 = vmatprep.subr.bf16.mxu0 0
    %714 = vmatpush1.bf16.msra.mxu0 %v692
    %715 = vmatprep.subr.bf16.mxu0 0
    %716 = vmatpush1.bf16.msra.mxu0 %v693
    %717 = vmatprep.subr.bf16.mxu0 0
    %718 = vmatpush1.bf16.msra.mxu0 %v694
    %719 = vmatprep.subr.bf16.mxu0 0
    %720 = vmatpush1.bf16.msra.mxu0 0
    %721 = vmatprep.subr.bf16.mxu0 0
    %722 = vmatpush1.bf16.msra.mxu0 0
    %723 = vmatprep.subr.bf16.mxu0 0
    %724 = vmatpush1.bf16.msra.mxu0 0
    %725 = vmatprep.subr.bf16.mxu0 0
    %726 = vmatpush1.bf16.msra.mxu0 0
    %727 = vmatprep.subr.bf16.mxu0 0
    %728 = vmatpush1.bf16.msra.mxu0 0
    %729 = vmatprep.subr.bf16.mxu0 0
    %730 = vmatpush1.bf16.msra.mxu0 0
    %731 = vmatprep.subr.bf16.mxu0 0
    %732 = vmatpush1.bf16.msra.mxu0 0
    %733 = vmatprep.subr.bf16.mxu0 0
    %734 = vmatpush1.bf16.msra.mxu0 0
    %735 = vmatprep.mubr.bf16.mxu0 0
    %736 = vmatmul.mubr.bf16.gmra.mrb[0].mxu0 %v637
    %v737 = vpop.f32.mrb[0].mxu0
    %v738 = vadd.f32 0.0, %v737
    %v739 = vpop.f32.mrb[0].mxu0
    %v740 = vpop.f32.mrb[0].mxu0
    %v741 = vadd.f32 0.0, %v740
    %v742 = vpop.f32.mrb[0].mxu0
    %743 = vdwg.mxu0
    %v744 = vadd.f32 %v629, %v738
    %v745 = vadd.f32 %v632, %v741
    %v746 = vlaneseq
    %v747 = vshrl.u32 %v746, 7
    %v748 = vsub.s32 0, %v747
    %v749 = vrot.slane %v66, %v748
    %v750 = vmul.f32 %v744, %v749
    %v751 = vmul.f32 %v745, %v749
    %v752 = vlaneseq
    %v753 = vshrl.u32 %v752, 7
    %v754 = vsub.s32 0, %v753
    %v755 = vrot.slane %v67, %v754
    %v756 = vadd.f32 %v750, %v755
    %v757 = vadd.f32 %v751, %v755
    %v758 = vadd.f32 %v756, %v70
    %v759 = vadd.f32 %v757, %v71
    %v760 = vmax.f32 %v758, 0.0
    %v761 = vmax.f32 %v759, 0.0
    %762 = vst [vmem:[#allocation10] sm:$0xff] %v760
    %763 = vst [vmem:[#allocation10 + $0x8] sm:$0xff] %v761
    %s764 = scalar_lea.vmem [#allocation4], 8
    %v765 = vld [vmem:[%s764] sm:$0xf]
    %v766 = vld [vmem:[%s764 + $0x4] sm:$0xf]
    %v767 = vunpack.c.l.bf16 %v765
    %v768 = vunpack.c.l.bf16 %v766
    %769 = vst [vmem:[#allocation2 + $0x8] sm:$0xff] %v767
    %770 = vst [vmem:[#allocation2 + $0x10] sm:$0xff] %v768
    %v771 = vld [vmem:[#allocation2 + $0x7] sm:$0xff]
    %v772 = vld [vmem:[#allocation2 + $0xf] sm:$0xff]
    %v773 = vpack.c.bf16 %v772, %v771
    %v774 = vld [vmem:[#allocation7] sm:$0xf]
    %v775 = vld [vmem:[#allocation7 + $0x4] sm:$0xf]
    %v776 = vld [vmem:[#allocation7 + $0x8] sm:$0xf]
    %v777 = vld [vmem:[#allocation7 + $0xc] sm:$0xf]
    %v778 = vld [vmem:[#allocation7 + $0x10] sm:$0xf]
    %v779 = vld [vmem:[#allocation7 + $0x14] sm:$0xf]
    %v780 = vld [vmem:[#allocation7 + $0x18] sm:$0xf]
    %v781 = vld [vmem:[#allocation7 + $0x1c] sm:$0xf]
    %v782 = vld [vmem:[#allocation7 + $0x20] sm:$0xf]
    %v783 = vld [vmem:[#allocation7 + $0x24] sm:$0xf]
    %v784 = vld [vmem:[#allocation7 + $0x28] sm:$0xf]
    %v785 = vld [vmem:[#allocation7 + $0x2c] sm:$0xf]
    %v786 = vld [vmem:[#allocation7 + $0x30] sm:$0xf]
    %v787 = vld [vmem:[#allocation7 + $0x34] sm:$0xf]
    %v788 = vld [vmem:[#allocation7 + $0x38] sm:$0xf]
    %v789 = vld [vmem:[#allocation7 + $0x3c] sm:$0xf]
    %v790 = vld [vmem:[#allocation2 + $0x8] sm:$0xff]
    %v791 = vld [vmem:[#allocation2 + $0x10] sm:$0xff]
    %v792 = vpack.c.bf16 %v791, %v790
    %v793 = vld [vmem:[%s96] sm:$0xf]
    %v794 = vld [vmem:[%s96 + $0x4] sm:$0xf]
    %v795 = vld [vmem:[%s96 + $0x8] sm:$0xf]
    %v796 = vld [vmem:[%s96 + $0xc] sm:$0xf]
    %v797 = vld [vmem:[%s96 + $0x10] sm:$0xf]
    %v798 = vld [vmem:[%s96 + $0x14] sm:$0xf]
    %v799 = vld [vmem:[%s96 + $0x18] sm:$0xf]
    %v800 = vld [vmem:[%s96 + $0x1c] sm:$0xf]
    %v801 = vld [vmem:[%s96 + $0x20] sm:$0xf]
    %v802 = vld [vmem:[%s96 + $0x24] sm:$0xf]
    %v803 = vld [vmem:[%s96 + $0x28] sm:$0xf]
    %v804 = vld [vmem:[%s96 + $0x2c] sm:$0xf]
    %v805 = vld [vmem:[%s96 + $0x30] sm:$0xf]
    %v806 = vld [vmem:[%s96 + $0x34] sm:$0xf]
    %v807 = vld [vmem:[%s96 + $0x38] sm:$0xf]
    %v808 = vld [vmem:[%s96 + $0x3c] sm:$0xf]
    %v825 = vunpack.c.l.b16 %v793
    %v826 = vunpack.c.l.b16 %v794
    %v827 = vunpack.c.l.b16 %v795
    %v828 = vunpack.c.l.b16 %v796
    %v829 = vunpack.c.l.b16 %v797
    %v830 = vunpack.c.l.b16 %v798
    %v831 = vunpack.c.l.b16 %v799
    %v832 = vunpack.c.l.b16 %v800
    %v833 = vunpack.c.l.b16 %v801
    %v834 = vunpack.c.l.b16 %v802
    %v835 = vunpack.c.l.b16 %v803
    %v836 = vunpack.c.l.b16 %v804
    %v837 = vunpack.c.l.b16 %v805
    %v838 = vunpack.c.l.b16 %v806
    %v839 = vunpack.c.l.b16 %v807
    %v840 = vunpack.c.l.b16 %v808
    %v841 = vpack.c.b16 %v826, %v825
    %v842 = vpack.c.b16 %v828, %v827
    %v843 = vpack.c.b16 %v830, %v829
    %v844 = vpack.c.b16 %v832, %v831
    %v845 = vpack.c.b16 %v834, %v833
    %v846 = vpack.c.b16 %v836, %v835
    %v847 = vpack.c.b16 %v838, %v837
    %v848 = vpack.c.b16 %v840, %v839
    %857 = vmatprep.subr.bf16.mxu0 0
    %858 = vmatpush1.bf16.msra.mxu0 %v841
    %859 = vmatprep.subr.bf16.mxu0 0
    %860 = vmatpush1.bf16.msra.mxu0 %v842
    %861 = vmatprep.subr.bf16.mxu0 0
    %862 = vmatpush1.bf16.msra.mxu0 %v843
    %863 = vmatprep.subr.bf16.mxu0 0
    %864 = vmatpush1.bf16.msra.mxu0 %v844
    %865 = vmatprep.subr.bf16.mxu0 0
    %866 = vmatpush1.bf16.msra.mxu0 %v845
    %867 = vmatprep.subr.bf16.mxu0 0
    %868 = vmatpush1.bf16.msra.mxu0 %v846
    %869 = vmatprep.subr.bf16.mxu0 0
    %870 = vmatpush1.bf16.msra.mxu0 %v847
    %871 = vmatprep.subr.bf16.mxu0 0
    %872 = vmatpush1.bf16.msra.mxu0 %v848
    %873 = vmatprep.subr.bf16.mxu0 0
    %874 = vmatpush1.bf16.msra.mxu0 0
    %875 = vmatprep.subr.bf16.mxu0 0
    %876 = vmatpush1.bf16.msra.mxu0 0
    %877 = vmatprep.subr.bf16.mxu0 0
    %878 = vmatpush1.bf16.msra.mxu0 0
    %879 = vmatprep.subr.bf16.mxu0 0
    %880 = vmatpush1.bf16.msra.mxu0 0
    %881 = vmatprep.subr.bf16.mxu0 0
    %882 = vmatpush1.bf16.msra.mxu0 0
    %883 = vmatprep.subr.bf16.mxu0 0
    %884 = vmatpush1.bf16.msra.mxu0 0
    %885 = vmatprep.subr.bf16.mxu0 0
    %886 = vmatpush1.bf16.msra.mxu0 0
    %887 = vmatprep.subr.bf16.mxu0 0
    %888 = vmatpush1.bf16.msra.mxu0 0
    %889 = vmatprep.mubr.bf16.mxu0 0
    %890 = vmatmul.mubr.bf16.gmra.mrb[0].mxu0 %v792
    %v891 = vpop.f32.mrb[0].mxu0
    %v892 = vadd.f32 0.0, %v891
    %v893 = vpop.f32.mrb[0].mxu0
    %v894 = vpop.f32.mrb[0].mxu0
    %v895 = vadd.f32 0.0, %v894
    %v896 = vpop.f32.mrb[0].mxu0
    %897 = vdwg.mxu0
    %v914 = vunpack.c.l.b16 %v774
    %v915 = vunpack.c.l.b16 %v775
    %v916 = vunpack.c.l.b16 %v776
    %v917 = vunpack.c.l.b16 %v777
    %v918 = vunpack.c.l.b16 %v778
    %v919 = vunpack.c.l.b16 %v779
    %v920 = vunpack.c.l.b16 %v780
    %v921 = vunpack.c.l.b16 %v781
    %v922 = vunpack.c.l.b16 %v782
    %v923 = vunpack.c.l.b16 %v783
    %v924 = vunpack.c.l.b16 %v784
    %v925 = vunpack.c.l.b16 %v785
    %v926 = vunpack.c.l.b16 %v786
    %v927 = vunpack.c.l.b16 %v787
    %v928 = vunpack.c.l.b16 %v788
    %v929 = vunpack.c.l.b16 %v789
    %v930 = vpack.c.b16 %v915, %v914
    %v931 = vpack.c.b16 %v917, %v916
    %v932 = vpack.c.b16 %v919, %v918
    %v933 = vpack.c.b16 %v921, %v920
    %v934 = vpack.c.b16 %v923, %v922
    %v935 = vpack.c.b16 %v925, %v924
    %v936 = vpack.c.b16 %v927, %v926
    %v937 = vpack.c.b16 %v929, %v928
    %946 = vmatprep.subr.bf16.mxu0 0
    %947 = vmatpush1.bf16.msra.mxu0 %v930
    %948 = vmatprep.subr.bf16.mxu0 0
    %949 = vmatpush1.bf16.msra.mxu0 %v931
    %950 = vmatprep.subr.bf16.mxu0 0
    %951 = vmatpush1.bf16.msra.mxu0 %v932
    %952 = vmatprep.subr.bf16.mxu0 0
    %953 = vmatpush1.bf16.msra.mxu0 %v933
    %954 = vmatprep.subr.bf16.mxu0 0
    %955 = vmatpush1.bf16.msra.mxu0 %v934
    %956 = vmatprep.subr.bf16.mxu0 0
    %957 = vmatpush1.bf16.msra.mxu0 %v935
    %958 = vmatprep.subr.bf16.mxu0 0
    %959 = vmatpush1.bf16.msra.mxu0 %v936
    %960 = vmatprep.subr.bf16.mxu0 0
    %961 = vmatpush1.bf16.msra.mxu0 %v937
    %962 = vmatprep.subr.bf16.mxu0 0
    %963 = vmatpush1.bf16.msra.mxu0 0
    %964 = vmatprep.subr.bf16.mxu0 0
    %965 = vmatpush1.bf16.msra.mxu0 0
    %966 = vmatprep.subr.bf16.mxu0 0
    %967 = vmatpush1.bf16.msra.mxu0 0
    %968 = vmatprep.subr.bf16.mxu0 0
    %969 = vmatpush1.bf16.msra.mxu0 0
    %970 = vmatprep.subr.bf16.mxu0 0
    %971 = vmatpush1.bf16.msra.mxu0 0
    %972 = vmatprep.subr.bf16.mxu0 0
    %973 = vmatpush1.bf16.msra.mxu0 0
    %974 = vmatprep.subr.bf16.mxu0 0
    %975 = vmatpush1.bf16.msra.mxu0 0
    %976 = vmatprep.subr.bf16.mxu0 0
    %977 = vmatpush1.bf16.msra.mxu0 0
    %978 = vmatprep.mubr.bf16.mxu0 0
    %979 = vmatmul.mubr.bf16.gmra.mrb[0].mxu0 %v773
    %v980 = vpop.f32.mrb[0].mxu0
    %v981 = vadd.f32 %v892, %v980
    %v982 = vpop.f32.mrb[0].mxu0
    %v983 = vpop.f32.mrb[0].mxu0
    %v984 = vadd.f32 %v895, %v983
    %v985 = vpop.f32.mrb[0].mxu0
    %986 = vdwg.mxu0
    %v987 = vld [vmem:[#allocation2 + $0x9] sm:$0xff]
    %v988 = vld [vmem:[#allocation2 + $0x11] sm:$0xff]
    %v989 = vpack.c.bf16 %v988, %v987
    %v990 = vld [vmem:[%s294] sm:$0xf]
    %v991 = vld [vmem:[%s294 + $0x4] sm:$0xf]
    %v992 = vld [vmem:[%s294 + $0x8] sm:$0xf]
    %v993 = vld [vmem:[%s294 + $0xc] sm:$0xf]
    %v994 = vld [vmem:[%s294 + $0x10] sm:$0xf]
    %v995 = vld [vmem:[%s294 + $0x14] sm:$0xf]
    %v996 = vld [vmem:[%s294 + $0x18] sm:$0xf]
    %v997 = vld [vmem:[%s294 + $0x1c] sm:$0xf]
    %v998 = vld [vmem:[%s294 + $0x20] sm:$0xf]
    %v999 = vld [vmem:[%s294 + $0x24] sm:$0xf]
    %v1000 = vld [vmem:[%s294 + $0x28] sm:$0xf]
    %v1001 = vld [vmem:[%s294 + $0x2c] sm:$0xf]
    %v1002 = vld [vmem:[%s294 + $0x30] sm:$0xf]
    %v1003 = vld [vmem:[%s294 + $0x34] sm:$0xf]
    %v1004 = vld [vmem:[%s294 + $0x38] sm:$0xf]
    %v1005 = vld [vmem:[%s294 + $0x3c] sm:$0xf]
    %v1022 = vunpack.c.l.b16 %v990
    %v1023 = vunpack.c.l.b16 %v991
    %v1024 = vunpack.c.l.b16 %v992
    %v1025 = vunpack.c.l.b16 %v993
    %v1026 = vunpack.c.l.b16 %v994
    %v1027 = vunpack.c.l.b16 %v995
    %v1028 = vunpack.c.l.b16 %v996
    %v1029 = vunpack.c.l.b16 %v997
    %v1030 = vunpack.c.l.b16 %v998
    %v1031 = vunpack.c.l.b16 %v999
    %v1032 = vunpack.c.l.b16 %v1000
    %v1033 = vunpack.c.l.b16 %v1001
    %v1034 = vunpack.c.l.b16 %v1002
    %v1035 = vunpack.c.l.b16 %v1003
    %v1036 = vunpack.c.l.b16 %v1004
    %v1037 = vunpack.c.l.b16 %v1005
    %v1038 = vpack.c.b16 %v1023, %v1022
    %v1039 = vpack.c.b16 %v1025, %v1024
    %v1040 = vpack.c.b16 %v1027, %v1026
    %v1041 = vpack.c.b16 %v1029, %v1028
    %v1042 = vpack.c.b16 %v1031, %v1030
    %v1043 = vpack.c.b16 %v1033, %v1032
    %v1044 = vpack.c.b16 %v1035, %v1034
    %v1045 = vpack.c.b16 %v1037, %v1036
    %1054 = vmatprep.subr.bf16.mxu0 0
    %1055 = vmatpush1.bf16.msra.mxu0 %v1038
    %1056 = vmatprep.subr.bf16.mxu0 0
    %1057 = vmatpush1.bf16.msra.mxu0 %v1039
    %1058 = vmatprep.subr.bf16.mxu0 0
    %1059 = vmatpush1.bf16.msra.mxu0 %v1040
    %1060 = vmatprep.subr.bf16.mxu0 0
    %1061 = vmatpush1.bf16.msra.mxu0 %v1041
    %1062 = vmatprep.subr.bf16.mxu0 0
    %1063 = vmatpush1.bf16.msra.mxu0 %v1042
    %1064 = vmatprep.subr.bf16.mxu0 0
    %1065 = vmatpush1.bf16.msra.mxu0 %v1043
    %1066 = vmatprep.subr.bf16.mxu0 0
    %1067 = vmatpush1.bf16.msra.mxu0 %v1044
    %1068 = vmatprep.subr.bf16.mxu0 0
    %1069 = vmatpush1.bf16.msra.mxu0 %v1045
    %1070 = vmatprep.subr.bf16.mxu0 0
    %1071 = vmatpush1.bf16.msra.mxu0 0
    %1072 = vmatprep.subr.bf16.mxu0 0
    %1073 = vmatpush1.bf16.msra.mxu0 0
    %1074 = vmatprep.subr.bf16.mxu0 0
    %1075 = vmatpush1.bf16.msra.mxu0 0
    %1076 = vmatprep.subr.bf16.mxu0 0
    %1077 = vmatpush1.bf16.msra.mxu0 0
    %1078 = vmatprep.subr.bf16.mxu0 0
    %1079 = vmatpush1.bf16.msra.mxu0 0
    %1080 = vmatprep.subr.bf16.mxu0 0
    %1081 = vmatpush1.bf16.msra.mxu0 0
    %1082 = vmatprep.subr.bf16.mxu0 0
    %1083 = vmatpush1.bf16.msra.mxu0 0
    %1084 = vmatprep.subr.bf16.mxu0 0
    %1085 = vmatpush1.bf16.msra.mxu0 0
    %1086 = vmatprep.mubr.bf16.mxu0 0
    %1087 = vmatmul.mubr.bf16.gmra.mrb[0].mxu0 %v989
    %v1088 = vpop.f32.mrb[0].mxu0
    %v1089 = vadd.f32 0.0, %v1088
    %v1090 = vpop.f32.mrb[0].mxu0
    %v1091 = vpop.f32.mrb[0].mxu0
    %v1092 = vadd.f32 0.0, %v1091
    %v1093 = vpop.f32.mrb[0].mxu0
    %1094 = vdwg.mxu0
    %v1095 = vadd.f32 %v981, %v1089
    %v1096 = vadd.f32 %v984, %v1092
    %v1097 = vmul.f32 %v1095, %v405
    %v1098 = vmul.f32 %v1096, %v405
    %v1099 = vadd.f32 %v1097, %v411
    %v1100 = vadd.f32 %v1098, %v411
    %v1101 = vmax.f32 %v1099, 0.0
    %v1102 = vmax.f32 %v1100, 0.0
    %1103 = vst [vmem:[#allocation3 + $0x8] sm:$0xff] %v1101
    %1104 = vst [vmem:[#allocation3 + $0x10] sm:$0xff] %v1102
    %v1105 = vld [vmem:[#allocation3 + $0x7] sm:$0xff]
    %v1106 = vld [vmem:[#allocation3 + $0xf] sm:$0xff]
    %v1107 = vpack.c.bf16 %v1106, %v1105
    %v1108 = vld [vmem:[#allocation9] sm:$0xf]
    %v1109 = vld [vmem:[#allocation9 + $0x4] sm:$0xf]
    %v1110 = vld [vmem:[#allocation9 + $0x8] sm:$0xf]
    %v1111 = vld [vmem:[#allocation9 + $0xc] sm:$0xf]
    %v1112 = vld [vmem:[#allocation9 + $0x10] sm:$0xf]
    %v1113 = vld [vmem:[#allocation9 + $0x14] sm:$0xf]
    %v1114 = vld [vmem:[#allocation9 + $0x18] sm:$0xf]
    %v1115 = vld [vmem:[#allocation9 + $0x1c] sm:$0xf]
    %v1116 = vld [vmem:[#allocation9 + $0x20] sm:$0xf]
    %v1117 = vld [vmem:[#allocation9 + $0x24] sm:$0xf]
    %v1118 = vld [vmem:[#allocation9 + $0x28] sm:$0xf]
    %v1119 = vld [vmem:[#allocation9 + $0x2c] sm:$0xf]
    %v1120 = vld [vmem:[#allocation9 + $0x30] sm:$0xf]
    %v1121 = vld [vmem:[#allocation9 + $0x34] sm:$0xf]
    %v1122 = vld [vmem:[#allocation9 + $0x38] sm:$0xf]
    %v1123 = vld [vmem:[#allocation9 + $0x3c] sm:$0xf]
    %v1124 = vld [vmem:[#allocation3 + $0x8] sm:$0xff]
    %v1125 = vld [vmem:[#allocation3 + $0x10] sm:$0xff]
    %v1126 = vpack.c.bf16 %v1125, %v1124
    %v1127 = vld [vmem:[%s440] sm:$0xf]
    %v1128 = vld [vmem:[%s440 + $0x4] sm:$0xf]
    %v1129 = vld [vmem:[%s440 + $0x8] sm:$0xf]
    %v1130 = vld [vmem:[%s440 + $0xc] sm:$0xf]
    %v1131 = vld [vmem:[%s440 + $0x10] sm:$0xf]
    %v1132 = vld [vmem:[%s440 + $0x14] sm:$0xf]
    %v1133 = vld [vmem:[%s440 + $0x18] sm:$0xf]
    %v1134 = vld [vmem:[%s440 + $0x1c] sm:$0xf]
    %v1135 = vld [vmem:[%s440 + $0x20] sm:$0xf]
    %v1136 = vld [vmem:[%s440 + $0x24] sm:$0xf]
    %v1137 = vld [vmem:[%s440 + $0x28] sm:$0xf]
    %v1138 = vld [vmem:[%s440 + $0x2c] sm:$0xf]
    %v1139 = vld [vmem:[%s440 + $0x30] sm:$0xf]
    %v1140 = vld [vmem:[%s440 + $0x34] sm:$0xf]
    %v1141 = vld [vmem:[%s440 + $0x38] sm:$0xf]
    %v1142 = vld [vmem:[%s440 + $0x3c] sm:$0xf]
    %v1159 = vunpack.c.l.b16 %v1127
    %v1160 = vunpack.c.l.b16 %v1128
    %v1161 = vunpack.c.l.b16 %v1129
    %v1162 = vunpack.c.l.b16 %v1130
    %v1163 = vunpack.c.l.b16 %v1131
    %v1164 = vunpack.c.l.b16 %v1132
    %v1165 = vunpack.c.l.b16 %v1133
    %v1166 = vunpack.c.l.b16 %v1134
    %v1167 = vunpack.c.l.b16 %v1135
    %v1168 = vunpack.c.l.b16 %v1136
    %v1169 = vunpack.c.l.b16 %v1137
    %v1170 = vunpack.c.l.b16 %v1138
    %v1171 = vunpack.c.l.b16 %v1139
    %v1172 = vunpack.c.l.b16 %v1140
    %v1173 = vunpack.c.l.b16 %v1141
    %v1174 = vunpack.c.l.b16 %v1142
    %v1175 = vpack.c.b16 %v1160, %v1159
    %v1176 = vpack.c.b16 %v1162, %v1161
    %v1177 = vpack.c.b16 %v1164, %v1163
    %v1178 = vpack.c.b16 %v1166, %v1165
    %v1179 = vpack.c.b16 %v1168, %v1167
    %v1180 = vpack.c.b16 %v1170, %v1169
    %v1181 = vpack.c.b16 %v1172, %v1171
    %v1182 = vpack.c.b16 %v1174, %v1173
    %1191 = vmatprep.subr.bf16.mxu0 0
    %1192 = vmatpush1.bf16.msra.mxu0 %v1175
    %1193 = vmatprep.subr.bf16.mxu0 0
    %1194 = vmatpush1.bf16.msra.mxu0 %v1176
    %1195 = vmatprep.subr.bf16.mxu0 0
    %1196 = vmatpush1.bf16.msra.mxu0 %v1177
    %1197 = vmatprep.subr.bf16.mxu0 0
    %1198 = vmatpush1.bf16.msra.mxu0 %v1178
    %1199 = vmatprep.subr.bf16.mxu0 0
    %1200 = vmatpush1.bf16.msra.mxu0 %v1179
    %1201 = vmatprep.subr.bf16.mxu0 0
    %1202 = vmatpush1.bf16.msra.mxu0 %v1180
    %1203 = vmatprep.subr.bf16.mxu0 0
    %1204 = vmatpush1.bf16.msra.mxu0 %v1181
    %1205 = vmatprep.subr.bf16.mxu0 0
    %1206 = vmatpush1.bf16.msra.mxu0 %v1182
    %1207 = vmatprep.subr.bf16.mxu0 0
    %1208 = vmatpush1.bf16.msra.mxu0 0
    %1209 = vmatprep.subr.bf16.mxu0 0
    %1210 = vmatpush1.bf16.msra.mxu0 0
    %1211 = vmatprep.subr.bf16.mxu0 0
    %1212 = vmatpush1.bf16.msra.mxu0 0
    %1213 = vmatprep.subr.bf16.mxu0 0
    %1214 = vmatpush1.bf16.msra.mxu0 0
    %1215 = vmatprep.subr.bf16.mxu0 0
    %1216 = vmatpush1.bf16.msra.mxu0 0
    %1217 = vmatprep.subr.bf16.mxu0 0
    %1218 = vmatpush1.bf16.msra.mxu0 0
    %1219 = vmatprep.subr.bf16.mxu0 0
    %1220 = vmatpush1.bf16.msra.mxu0 0
    %1221 = vmatprep.subr.bf16.mxu0 0
    %1222 = vmatpush1.bf16.msra.mxu0 0
    %1223 = vmatprep.mubr.bf16.mxu0 0
    %1224 = vmatmul.mubr.bf16.gmra.mrb[0].mxu0 %v1126
    %v1225 = vpop.f32.mrb[0].mxu0
    %v1226 = vadd.f32 0.0, %v1225
    %v1227 = vpop.f32.mrb[0].mxu0
    %v1228 = vpop.f32.mrb[0].mxu0
    %v1229 = vadd.f32 0.0, %v1228
    %v1230 = vpop.f32.mrb[0].mxu0
    %1231 = vdwg.mxu0
    %v1248 = vunpack.c.l.b16 %v1108
    %v1249 = vunpack.c.l.b16 %v1109
    %v1250 = vunpack.c.l.b16 %v1110
    %v1251 = vunpack.c.l.b16 %v1111
    %v1252 = vunpack.c.l.b16 %v1112
    %v1253 = vunpack.c.l.b16 %v1113
    %v1254 = vunpack.c.l.b16 %v1114
    %v1255 = vunpack.c.l.b16 %v1115
    %v1256 = vunpack.c.l.b16 %v1116
    %v1257 = vunpack.c.l.b16 %v1117
    %v1258 = vunpack.c.l.b16 %v1118
    %v1259 = vunpack.c.l.b16 %v1119
    %v1260 = vunpack.c.l.b16 %v1120
    %v1261 = vunpack.c.l.b16 %v1121
    %v1262 = vunpack.c.l.b16 %v1122
    %v1263 = vunpack.c.l.b16 %v1123
    %v1264 = vpack.c.b16 %v1249, %v1248
    %v1265 = vpack.c.b16 %v1251, %v1250
    %v1266 = vpack.c.b16 %v1253, %v1252
    %v1267 = vpack.c.b16 %v1255, %v1254
    %v1268 = vpack.c.b16 %v1257, %v1256
    %v1269 = vpack.c.b16 %v1259, %v1258
    %v1270 = vpack.c.b16 %v1261, %v1260
    %v1271 = vpack.c.b16 %v1263, %v1262
    %1280 = vmatprep.subr.bf16.mxu0 0
    %1281 = vmatpush1.bf16.msra.mxu0 %v1264
    %1282 = vmatprep.subr.bf16.mxu0 0
    %1283 = vmatpush1.bf16.msra.mxu0 %v1265
    %1284 = vmatprep.subr.bf16.mxu0 0
    %1285 = vmatpush1.bf16.msra.mxu0 %v1266
    %1286 = vmatprep.subr.bf16.mxu0 0
    %1287 = vmatpush1.bf16.msra.mxu0 %v1267
    %1288 = vmatprep.subr.bf16.mxu0 0
    %1289 = vmatpush1.bf16.msra.mxu0 %v1268
    %1290 = vmatprep.subr.bf16.mxu0 0
    %1291 = vmatpush1.bf16.msra.mxu0 %v1269
    %1292 = vmatprep.subr.bf16.mxu0 0
    %1293 = vmatpush1.bf16.msra.mxu0 %v1270
    %1294 = vmatprep.subr.bf16.mxu0 0
    %1295 = vmatpush1.bf16.msra.mxu0 %v1271
    %1296 = vmatprep.subr.bf16.mxu0 0
    %1297 = vmatpush1.bf16.msra.mxu0 0
    %1298 = vmatprep.subr.bf16.mxu0 0
    %1299 = vmatpush1.bf16.msra.mxu0 0
    %1300 = vmatprep.subr.bf16.mxu0 0
    %1301 = vmatpush1.bf16.msra.mxu0 0
    %1302 = vmatprep.subr.bf16.mxu0 0
    %1303 = vmatpush1.bf16.msra.mxu0 0
    %1304 = vmatprep.subr.bf16.mxu0 0
    %1305 = vmatpush1.bf16.msra.mxu0 0
    %1306 = vmatprep.subr.bf16.mxu0 0
    %1307 = vmatpush1.bf16.msra.mxu0 0
    %1308 = vmatprep.subr.bf16.mxu0 0
    %1309 = vmatpush1.bf16.msra.mxu0 0
    %1310 = vmatprep.subr.bf16.mxu0 0
    %1311 = vmatpush1.bf16.msra.mxu0 0
    %1312 = vmatprep.mubr.bf16.mxu0 0
    %1313 = vmatmul.mubr.bf16.gmra.mrb[0].mxu0 %v1107
    %v1314 = vpop.f32.mrb[0].mxu0
    %v1315 = vadd.f32 %v1226, %v1314
    %v1316 = vpop.f32.mrb[0].mxu0
    %v1317 = vpop.f32.mrb[0].mxu0
    %v1318 = vadd.f32 %v1229, %v1317
    %v1319 = vpop.f32.mrb[0].mxu0
    %1320 = vdwg.mxu0
    %v1321 = vld [vmem:[#allocation3 + $0x9] sm:$0xff]
    %v1322 = vld [vmem:[#allocation3 + $0x11] sm:$0xff]
    %v1323 = vpack.c.bf16 %v1322, %v1321
    %v1324 = vld [vmem:[%s638] sm:$0xf]
    %v1325 = vld [vmem:[%s638 + $0x4] sm:$0xf]
    %v1326 = vld [vmem:[%s638 + $0x8] sm:$0xf]
    %v1327 = vld [vmem:[%s638 + $0xc] sm:$0xf]
    %v1328 = vld [vmem:[%s638 + $0x10] sm:$0xf]
    %v1329 = vld [vmem:[%s638 + $0x14] sm:$0xf]
    %v1330 = vld [vmem:[%s638 + $0x18] sm:$0xf]
    %v1331 = vld [vmem:[%s638 + $0x1c] sm:$0xf]
    %v1332 = vld [vmem:[%s638 + $0x20] sm:$0xf]
    %v1333 = vld [vmem:[%s638 + $0x24] sm:$0xf]
    %v1334 = vld [vmem:[%s638 + $0x28] sm:$0xf]
    %v1335 = vld [vmem:[%s638 + $0x2c] sm:$0xf]
    %v1336 = vld [vmem:[%s638 + $0x30] sm:$0xf]
    %v1337 = vld [vmem:[%s638 + $0x34] sm:$0xf]
    %v1338 = vld [vmem:[%s638 + $0x38] sm:$0xf]
    %v1339 = vld [vmem:[%s638 + $0x3c] sm:$0xf]
    %v1356 = vunpack.c.l.b16 %v1324
    %v1357 = vunpack.c.l.b16 %v1325
    %v1358 = vunpack.c.l.b16 %v1326
    %v1359 = vunpack.c.l.b16 %v1327
    %v1360 = vunpack.c.l.b16 %v1328
    %v1361 = vunpack.c.l.b16 %v1329
    %v1362 = vunpack.c.l.b16 %v1330
    %v1363 = vunpack.c.l.b16 %v1331
    %v1364 = vunpack.c.l.b16 %v1332
    %v1365 = vunpack.c.l.b16 %v1333
    %v1366 = vunpack.c.l.b16 %v1334
    %v1367 = vunpack.c.l.b16 %v1335
    %v1368 = vunpack.c.l.b16 %v1336
    %v1369 = vunpack.c.l.b16 %v1337
    %v1370 = vunpack.c.l.b16 %v1338
    %v1371 = vunpack.c.l.b16 %v1339
    %v1372 = vpack.c.b16 %v1357, %v1356
    %v1373 = vpack.c.b16 %v1359, %v1358
    %v1374 = vpack.c.b16 %v1361, %v1360
    %v1375 = vpack.c.b16 %v1363, %v1362
    %v1376 = vpack.c.b16 %v1365, %v1364
    %v1377 = vpack.c.b16 %v1367, %v1366
    %v1378 = vpack.c.b16 %v1369, %v1368
    %v1379 = vpack.c.b16 %v1371, %v1370
    %1388 = vmatprep.subr.bf16.mxu0 0
    %1389 = vmatpush1.bf16.msra.mxu0 %v1372
    %1390 = vmatprep.subr.bf16.mxu0 0
    %1391 = vmatpush1.bf16.msra.mxu0 %v1373
    %1392 = vmatprep.subr.bf16.mxu0 0
    %1393 = vmatpush1.bf16.msra.mxu0 %v1374
    %1394 = vmatprep.subr.bf16.mxu0 0
    %1395 = vmatpush1.bf16.msra.mxu0 %v1375
    %1396 = vmatprep.subr.bf16.mxu0 0
    %1397 = vmatpush1.bf16.msra.mxu0 %v1376
    %1398 = vmatprep.subr.bf16.mxu0 0
    %1399 = vmatpush1.bf16.msra.mxu0 %v1377
    %1400 = vmatprep.subr.bf16.mxu0 0
    %1401 = vmatpush1.bf16.msra.mxu0 %v1378
    %1402 = vmatprep.subr.bf16.mxu0 0
    %1403 = vmatpush1.bf16.msra.mxu0 %v1379
    %1404 = vmatprep.subr.bf16.mxu0 0
    %1405 = vmatpush1.bf16.msra.mxu0 0
    %1406 = vmatprep.subr.bf16.mxu0 0
    %1407 = vmatpush1.bf16.msra.mxu0 0
    %1408 = vmatprep.subr.bf16.mxu0 0
    %1409 = vmatpush1.bf16.msra.mxu0 0
    %1410 = vmatprep.subr.bf16.mxu0 0
    %1411 = vmatpush1.bf16.msra.mxu0 0
    %1412 = vmatprep.subr.bf16.mxu0 0
    %1413 = vmatpush1.bf16.msra.mxu0 0
    %1414 = vmatprep.subr.bf16.mxu0 0
    %1415 = vmatpush1.bf16.msra.mxu0 0
    %1416 = vmatprep.subr.bf16.mxu0 0
    %1417 = vmatpush1.bf16.msra.mxu0 0
    %1418 = vmatprep.subr.bf16.mxu0 0
    %1419 = vmatpush1.bf16.msra.mxu0 0
    %1420 = vmatprep.mubr.bf16.mxu0 0
    %1421 = vmatmul.mubr.bf16.gmra.mrb[0].mxu0 %v1323
    %v1422 = vpop.f32.mrb[0].mxu0
    %v1423 = vadd.f32 0.0, %v1422
    %v1424 = vpop.f32.mrb[0].mxu0
    %v1425 = vpop.f32.mrb[0].mxu0
    %v1426 = vadd.f32 0.0, %v1425
    %v1427 = vpop.f32.mrb[0].mxu0
    %1428 = vdwg.mxu0
    %v1429 = vadd.f32 %v1315, %v1423
    %v1430 = vadd.f32 %v1318, %v1426
    %v1431 = vmul.f32 %v1429, %v749
    %v1432 = vmul.f32 %v1430, %v749
    %v1433 = vadd.f32 %v1431, %v755
    %v1434 = vadd.f32 %v1432, %v755
    %v1435 = vadd.f32 %v1433, %v767
    %v1436 = vadd.f32 %v1434, %v768
    %v1437 = vmax.f32 %v1435, 0.0
    %v1438 = vmax.f32 %v1436, 0.0
    %s1439 = scalar_lea.vmem [#allocation10], 16
    %1440 = vst [vmem:[%s1439] sm:$0xff] %v1437
    %1441 = vst [vmem:[%s1439 + $0x8] sm:$0xff] %v1438
    // Predicated region
    $region30: #{tpu_custom_call.1} parent=1 // pred_check
      _
    $region31: #{tpu_custom_call.1} parent=1 // pred_check_branch
      %1443 = sbr.rel (0) target = $region33
    $region32: #{tpu_custom_call.1} parent=1 // pred_region
      %s1445 = ssub.s32 512, 512
      %1446 = vsyncadd [#allocation6], %s1445
      %s1447 = sshll.u32 [#allocation10], 4
      %s1448 = int_to_ptr.vmem [resolvable:$true] %s1447
      %1453 = dma.vmem_to_hbm [thread:$0]  %s1448, 512, %s4, [#allocation6], 128, 128, 8
    $region33: #{tpu_custom_call.1} parent=1 // pred_fallthru
      _
    // Predicated region
    $region34: #{tpu_custom_call.1} parent=1 // pred_check
      _
    $region35: #{tpu_custom_call.1} parent=1 // pred_check_branch
      %1455 = sbr.rel (0) target = $region37
    $region36: #{tpu_custom_call.1} parent=1 // pred_region
      %1456 = dma.done [#allocation6], 512
    $region37: #{tpu_custom_call.1} parent=1 // pred_fallthru
      _
    %1457 = vsyncpa [#allocation5], 1
    %1458 = vsyncpa [#allocation8], 1
    %1459 = vsyncpa [#allocation6], 1

</llo_original>
